<compile_context>
chip_gen: v6e
topology: v6e:2x2x1
jax: 0.10.0
libtpu: 0.0.40
codegen_flags: <defaults>
</compile_context>

<pallas_src>
import jax
import jax.numpy as jnp
from jax.experimental import pallas as pl
from jax.experimental.pallas import tpu as pltpu


def channel_gate_kernel(x_ref, w1_ref, b1_ref, w2_ref, b2_ref, o_ref):
    nb, c, hw = x_ref.shape
    hidden = w1_ref.shape[0]

    # Upcast once; all arithmetic stays f32 (v5e VPU has no bf16).
    x = x_ref[...].astype(jnp.float32)                            # (nb, C, HW)

    # Global average pool as a batched MXU matmul against a 1/HW column.
    # Result is (nb, C, 1): C remains on sublanes, no cross-lane XLU reduce.
    inv_hw_col = jnp.full((nb, hw, 1), 1.0 / hw, dtype=jnp.float32)
    pooled = jnp.einsum('nch,nhk->nck', x, inv_hw_col,
                        preferred_element_type=jnp.float32)       # (nb, C, 1)

    # fc1 (1x1 conv C -> hidden) + bias + ReLU, as a batched column matmul.
    w1b = jnp.broadcast_to(w1_ref[...][None], (nb, hidden, c))
    h = jnp.einsum('njc,nck->njk', w1b, pooled,
                   preferred_element_type=jnp.float32) + b1_ref[...]   # (nb, hidden, 1)
    h = jnp.maximum(h, 0.0)

    # fc2 (1x1 conv hidden -> C) + bias + sigmoid, gate stays column-shaped.
    w2b = jnp.broadcast_to(w2_ref[...][None], (nb, c, hidden))
    g = jnp.einsum('ncj,njk->nck', w2b, h,
                   preferred_element_type=jnp.float32) + b2_ref[...]   # (nb, C, 1)
    g = jax.nn.sigmoid(g)

    # Gate the input: broadcast of (nb, C, 1) over the HW lane axis is a lane splat.
    o_ref[...] = (x * g).astype(o_ref.dtype)


def channel_gate(x, w1, b1, w2, b2, *, target_block_bytes=2 * 1024 * 1024):
    """x: (N, C, H, W); w1: (hidden, C); b1: (hidden, 1); w2: (C, hidden); b2: (C, 1)."""
    N, C, H, W = x.shape
    HW = H * W
    hidden = w1.shape[0]
    x_flat = x.reshape(N, C, HW)

    # Batch several samples per grid step: ~1-2 MiB of f32 compute footprint per
    # block (well under the 64/128 MiB VMEM of v7x/v6e/v5e even with double
    # buffering and the f32 intermediates).  Keep the grid length >= 2 so the
    # parallel batch axis can be sharded across v7x's two TensorCores.
    f32_bytes_per_sample = C * HW * 4
    nb = max(1, min(N, target_block_bytes // max(f32_bytes_per_sample, 1)))
    if nb >= N and N > 1:
        nb = pl.cdiv(N, 2)
    nb = int(nb)
    grid = (pl.cdiv(N, nb),)
    # NOTE: if N % nb != 0 the last block is batch-padded; gating is strictly
    # per-sample, so padded rows never contaminate valid rows and Pallas drops
    # the out-of-bounds output rows.

    out = pl.pallas_call(
        channel_gate_kernel,
        out_shape=jax.ShapeDtypeStruct((N, C, HW), x.dtype),
        grid_spec=pltpu.PrefetchScalarGridSpec(
            num_scalar_prefetch=0,
            grid=grid,
            in_specs=[
                pl.BlockSpec((nb, C, HW), lambda n: (n, 0, 0)),
                pl.BlockSpec((hidden, C), lambda n: (0, 0)),
                pl.BlockSpec((hidden, 1), lambda n: (0, 0)),
                pl.BlockSpec((C, hidden), lambda n: (0, 0)),
                pl.BlockSpec((C, 1), lambda n: (0, 0)),
            ],
            out_specs=pl.BlockSpec((nb, C, HW), lambda n: (n, 0, 0)),
        ),
        compiler_params=pltpu.CompilerParams(
            dimension_semantics=("parallel",),
            vmem_limit_bytes=32 * 1024 * 1024,
        ),
    )(x_flat, w1, b1, w2, b2)
    return out.reshape(N, C, H, W)


def channel_gate_ref(x, w1, b1, w2, b2):
    """Pure-JAX reference (same weight orientation as the kernel)."""
    pooled = jnp.mean(x, axis=(2, 3))                       # (N, C)
    h = jnp.maximum(pooled @ w1.T + b1[:, 0], 0.0)          # (N, hidden)
    g = jax.nn.sigmoid(h @ w2.T + b2[:, 0])                 # (N, C)
    return x * g[:, :, None, None]


if __name__ == "__main__":
    # Module config: ChannelGate(in_channels=64, reduction=16) -> hidden=4 (defaults otherwise)
    N, C, H, W = 8, 64, 16, 16
    reduction = 16
    hidden = C // reduction

    key = jax.random.PRNGKey(0)
    kx, k1, kb1, k2, kb2 = jax.random.split(key, 5)

    x = jax.random.normal(kx, (N, C, H, W), dtype=jnp.float32)
    # fc1: Conv2d(C, hidden, 1) weight (hidden, C, 1, 1) -> (hidden, C); bias -> (hidden, 1)
    w1 = jax.random.normal(k1, (hidden, C), dtype=jnp.float32) * 0.1
    b1 = jax.random.normal(kb1, (hidden, 1), dtype=jnp.float32) * 0.1
    # fc2: Conv2d(hidden, C, 1) weight (C, hidden, 1, 1) -> (C, hidden); bias -> (C, 1)
    w2 = jax.random.normal(k2, (C, hidden), dtype=jnp.float32) * 0.1
    b2 = jax.random.normal(kb2, (C, 1), dtype=jnp.float32) * 0.1

    # f32 end-to-end path
    out = jax.block_until_ready(channel_gate(x, w1, b1, w2, b2))
    ref = channel_gate_ref(x, w1, b1, w2, b2)
    assert out.shape == (N, C, H, W)
    assert jnp.allclose(out, ref, atol=1e-4, rtol=1e-4), "f32 mismatch vs reference"

    # bf16 I/O path (halves HBM traffic; compute stays f32 inside the kernel)
    x_bf = x.astype(jnp.bfloat16)
    out_bf = jax.block_until_ready(channel_gate(x_bf, w1, b1, w2, b2))
    ref_bf = channel_gate_ref(x_bf.astype(jnp.float32), w1, b1, w2, b2)
    assert out_bf.dtype == jnp.bfloat16
    assert jnp.allclose(out_bf.astype(jnp.float32), ref_bf, atol=3e-2, rtol=3e-2), \
        "bf16 mismatch vs reference"

    print("KERNEL_OK")
</pallas_src>

<mosaic_0001>
module attributes {stable_mosaic.version = 11 : i64} {
  func.func @channel_gate_kernel(%arg0: i32, %arg1: memref<4x64x256xf32, #tpu.memory_space<vmem>>, %arg2: memref<4x64xf32, #tpu.memory_space<vmem>>, %arg3: memref<4x1xf32, #tpu.memory_space<vmem>>, %arg4: memref<64x4xf32, #tpu.memory_space<vmem>>, %arg5: memref<64x1xf32, #tpu.memory_space<vmem>>, %arg6: memref<4x64x256xf32, #tpu.memory_space<vmem>>) attributes {dimension_semantics = [#tpu.dimension_semantics<parallel>], iteration_bounds = array<i64: 2>, scalar_prefetch = 0 : i64, scratch_operands = 0 : i64, tpu.core_type = #tpu.core_type<tc>, window_params = [{transform_indices = @transform_0, window_bounds = array<i64: 4, 64, 256>}, {pipeline_mode = #tpu.pipeline_mode<synchronous>, transform_indices = @transform_1, window_bounds = array<i64: 4, 64>}, {pipeline_mode = #tpu.pipeline_mode<synchronous>, transform_indices = @transform_2, window_bounds = array<i64: 4, 1>}, {pipeline_mode = #tpu.pipeline_mode<synchronous>, transform_indices = @transform_3, window_bounds = array<i64: 64, 4>}, {pipeline_mode = #tpu.pipeline_mode<synchronous>, transform_indices = @transform_4, window_bounds = array<i64: 64, 1>}, {transform_indices = @transform_5, window_bounds = array<i64: 4, 64, 256>}]} {
    %c0 = arith.constant 0 : index
    %c0_0 = arith.constant 0 : index
    %c0_1 = arith.constant 0 : index
    %0 = vector.load %arg1[%c0, %c0_0, %c0_1] : memref<4x64x256xf32, #tpu.memory_space<vmem>>, vector<4x64x256xf32>
    %cst = arith.constant 3.906250e-03 : f32
    %1 = vector.broadcast %cst : f32 to vector<4x256x1xf32>
    "tpu.trace_start"() <{level = 10 : i32, message = "nch,nhk->nck"}> : () -> ()
    %cst_2 = arith.constant dense<0.000000e+00> : vector<4x64x1xf32>
    %2 = tpu.matmul %0, %1, %cst_2 {dimension_numbers = #tpu.dot_dimension_numbers<[2], [1], [1], [2], [0, 0, 0, 1, 1, 2], [0], [0]>} : vector<4x64x256xf32>, vector<4x256x1xf32>, vector<4x64x1xf32> -> vector<4x64x1xf32>
    "tpu.trace_stop"() : () -> ()
    %c0_3 = arith.constant 0 : index
    %c0_4 = arith.constant 0 : index
    %3 = vector.load %arg2[%c0_3, %c0_4] : memref<4x64xf32, #tpu.memory_space<vmem>>, vector<4x64xf32>
    %4 = vector.shape_cast %3 : vector<4x64xf32> to vector<1x4x64xf32>
    %5 = vector.shape_cast %4 : vector<1x4x64xf32> to vector<1x4x64xf32>
    %6 = vector.broadcast %5 : vector<1x4x64xf32> to vector<4x4x64xf32>
    "tpu.trace_start"() <{level = 10 : i32, message = "njc,nck->njk"}> : () -> ()
    %cst_5 = arith.constant dense<0.000000e+00> : vector<4x4x1xf32>
    %7 = tpu.matmul %6, %2, %cst_5 {dimension_numbers = #tpu.dot_dimension_numbers<[2], [1], [1], [2], [0, 0, 0, 1, 1, 2], [0], [0]>} : vector<4x4x64xf32>, vector<4x64x1xf32>, vector<4x4x1xf32> -> vector<4x4x1xf32>
    "tpu.trace_stop"() : () -> ()
    %c0_6 = arith.constant 0 : index
    %c0_7 = arith.constant 0 : index
    %8 = vector.load %arg3[%c0_6, %c0_7] : memref<4x1xf32, #tpu.memory_space<vmem>>, vector<4x1xf32>
    %9 = vector.shape_cast %8 : vector<4x1xf32> to vector<1x4x1xf32>
    %10 = vector.broadcast %9 : vector<1x4x1xf32> to vector<4x4x1xf32>
    %11 = arith.addf %7, %10 : vector<4x4x1xf32>
    %cst_8 = arith.constant 0.000000e+00 : f32
    %12 = vector.broadcast %cst_8 : f32 to vector<4x4x1xf32>
    %13 = arith.maximumf %11, %12 : vector<4x4x1xf32>
    %c0_9 = arith.constant 0 : index
    %c0_10 = arith.constant 0 : index
    %14 = vector.load %arg4[%c0_9, %c0_10] : memref<64x4xf32, #tpu.memory_space<vmem>>, vector<64x4xf32>
    %15 = vector.shape_cast %14 : vector<64x4xf32> to vector<1x64x4xf32>
    %16 = vector.shape_cast %15 : vector<1x64x4xf32> to vector<1x64x4xf32>
    %17 = vector.broadcast %16 : vector<1x64x4xf32> to vector<4x64x4xf32>
    "tpu.trace_start"() <{level = 10 : i32, message = "ncj,njk->nck"}> : () -> ()
    %cst_11 = arith.constant dense<0.000000e+00> : vector<4x64x1xf32>
    %18 = tpu.matmul %17, %13, %cst_11 {dimension_numbers = #tpu.dot_dimension_numbers<[2], [1], [1], [2], [0, 0, 0, 1, 1, 2], [0], [0]>} : vector<4x64x4xf32>, vector<4x4x1xf32>, vector<4x64x1xf32> -> vector<4x64x1xf32>
    "tpu.trace_stop"() : () -> ()
    %c0_12 = arith.constant 0 : index
    %c0_13 = arith.constant 0 : index
    %19 = vector.load %arg5[%c0_12, %c0_13] : memref<64x1xf32, #tpu.memory_space<vmem>>, vector<64x1xf32>
    %20 = vector.shape_cast %19 : vector<64x1xf32> to vector<1x64x1xf32>
    %21 = vector.broadcast %20 : vector<1x64x1xf32> to vector<4x64x1xf32>
    %22 = arith.addf %18, %21 : vector<4x64x1xf32>
    %23 = arith.negf %22 : vector<4x64x1xf32>
    %24 = math.exp %23 : vector<4x64x1xf32>
    %cst_14 = arith.constant 1.000000e+00 : f32
    %25 = vector.broadcast %cst_14 : f32 to vector<4x64x1xf32>
    %26 = arith.addf %25, %24 : vector<4x64x1xf32>
    %27 = arith.divf %25, %26 : vector<4x64x1xf32>
    %28 = vector.broadcast %27 : vector<4x64x1xf32> to vector<4x64x256xf32>
    %29 = arith.mulf %0, %28 : vector<4x64x256xf32>
    %c0_15 = arith.constant 0 : index
    %c0_16 = arith.constant 0 : index
    %c0_17 = arith.constant 0 : index
    %30 = vector.load %arg6[%c0_15, %c0_16, %c0_17] : memref<4x64x256xf32, #tpu.memory_space<vmem>>, vector<4x64x256xf32>
    tpu.vector_store %arg6[%c0_15, %c0_16, %c0_17], %29 {strides = array<i32>} : memref<4x64x256xf32, #tpu.memory_space<vmem>>, vector<4x64x256xf32>,
    return
  }
  func.func @transform_0(%arg0: i32) -> (i32, i32, i32) {
    %c0_i32 = arith.constant 0 : i32
    %c0_i32_0 = arith.constant 0 : i32
    %c0_i32_1 = arith.constant 0 : i32
    return %arg0, %c0_i32, %c0_i32_0 : i32, i32, i32
  }
  func.func @transform_1(%arg0: i32) -> (i32, i32) {
    %c0_i32 = arith.constant 0 : i32
    %c0_i32_0 = arith.constant 0 : i32
    %c0_i32_1 = arith.constant 0 : i32
    return %c0_i32, %c0_i32_0 : i32, i32
  }
  func.func @transform_2(%arg0: i32) -> (i32, i32) {
    %c0_i32 = arith.constant 0 : i32
    %c0_i32_0 = arith.constant 0 : i32
    %c0_i32_1 = arith.constant 0 : i32
    return %c0_i32, %c0_i32_0 : i32, i32
  }
  func.func @transform_3(%arg0: i32) -> (i32, i32) {
    %c0_i32 = arith.constant 0 : i32
    %c0_i32_0 = arith.constant 0 : i32
    %c0_i32_1 = arith.constant 0 : i32
    return %c0_i32, %c0_i32_0 : i32, i32
  }
  func.func @transform_4(%arg0: i32) -> (i32, i32) {
    %c0_i32 = arith.constant 0 : i32
    %c0_i32_0 = arith.constant 0 : i32
    %c0_i32_1 = arith.constant 0 : i32
    return %c0_i32, %c0_i32_0 : i32, i32
  }
  func.func @transform_5(%arg0: i32) -> (i32, i32, i32) {
    %c0_i32 = arith.constant 0 : i32
    %c0_i32_0 = arith.constant 0 : i32
    %c0_i32_1 = arith.constant 0 : i32
    return %arg0, %c0_i32, %c0_i32_0 : i32, i32, i32
  }
}

</mosaic_0001>

<llo_original>
// kernel: tpu_custom_call.1
$region0: #{tpu_custom_call.1}
  #allocation0 [shape = 'u32[]', space=smem, size = 0x4, offset = 0x4, fixed_abs, tag = 'smem constant byte address 0x4 - core index']
  #allocation1 [shape = 'u32[144,128]{1,0:T(1,128)}', space=vmem, size = 0x12000, scoped, tag = 'internal scratch']
  %s0 = inlined_call_operand.hbm [shape: f32[8,64,256], index: 0, kind: input, shape index: {}]
  %s1 = inlined_call_operand.vmem [shape: f32[4,64], index: 1, kind: input, shape index: {}]
  %s2 = inlined_call_operand.vmem [shape: f32[4,1], index: 2, kind: input, shape index: {}]
  %s3 = inlined_call_operand.vmem [shape: f32[64,4], index: 3, kind: input, shape index: {}]
  %s4 = inlined_call_operand.vmem [shape: f32[64,1], index: 4, kind: input, shape index: {}]
  %s5 = inlined_call_operand.hbm [shape: f32[8,64,256], index: 5, kind: output, shape index: {}]
  %s6 = sld [smem:[#allocation0]]
  $region57: #{tpu_custom_call.1} parent=0
    _
  %s8 = ssub.s32 1, %s6
  %s9 = scalar_select 0, %s8, %s6
  $region1: #{tpu_custom_call.1} parent=0
    #allocation2 [shape = 'u8[524288]{0}', space=vmem, size = 0x80000, scoped, tag = 'input window, operand 0']
    #allocation3 [shape = 's32[2]{0}', space=sflag, size = 0x8, scoped, tag = 'scoped memory for tpu_custom_call.1']
    #allocation4 [shape = 's32[2]{0}', space=sflag, size = 0x8, scoped, tag = 'scoped memory for tpu_custom_call.1']
    #allocation5 [shape = 'u8[524288]{0}', space=vmem, size = 0x80000, scoped, tag = 'output window, operand 0']
    %10 = vsyncpa [#allocation3], 0
    %s11 = scalar_lea.sflag [#allocation3], 1
    %12 = vsyncpa %s11, 0
    %13 = vsyncpa [#allocation4], 0
    %s14 = scalar_lea.sflag [#allocation4], 1
    %15 = vsyncpa %s14, 0
    loop: start=0, step=1, limit=4
    $region2: #{tpu_custom_call.1} parent=1 // loop_pre_header
      _
    $region3: #{tpu_custom_call.1} parent=1 // loop_header
      %s17 = sphi 0, %s21
      %p18 = scmp.ge.s32.totalorder %s17, 4
      %s27 = sphi 0, %s29
      %s30 = sphi 0, %s27
      %s31 = sphi 0, %s30
      %s47 = sphi 0, %s31
      %s51 = sphi 0, %s51
      %s53 = sphi 0, %s51
      %s54 = sphi 0, %s53
      %s68 = sphi 0, %s54
      %s72 = sphi 0, %s72
      %s74 = sphi 0, %s72
      %s75 = sphi 0, %s74
      %s89 = sphi 0, %s75
      %s93 = sphi 0, %s93
      %s95 = sphi 0, %s93
      %s96 = sphi 0, %s95
      %s110 = sphi 0, %s96
      %s114 = sphi 0, %s114
      %s116 = sphi 0, %s114
      %s117 = sphi 0, %s116
      %s131 = sphi 0, %s117
      %s137 = sphi 0, %s139
      %s140 = sphi 0, %s137
      %s141 = sphi 0, %s140
      %s157 = sphi 0, %s141
    $region4: #{tpu_custom_call.1} parent=1 // loop_header_branch
      %20 = sbr.rel (%p18) target = $region8
    $region5: #{tpu_custom_call.1} parent=1 // loop_body
      %s22 = ssub.s32 %s17, 1
      %s23 = ssub.s32 %s17, 2
      %s24 = sadd.s32 %s17, 1
      %s25 = ssub.s32 %s17, %s24
      %p26 = scmp.eq.s32.totalorder %s25, 0
      %s28 = sadd.s32 %s27, 1
      %s29 = scalar_select %p26, %s27, %s28
      %p32 = pneg %p26
      %p33 = scmp.eq.s32.totalorder %s17, 1
      %p34 = por %p32, %p33
      %p35 = scmp.ne.s32.totalorder %s27, %s30
      %p36 = scmp.eq.s32.totalorder %s17, 0
      %p37 = por %p35, %p36
      %p38 = scmp.ne.s32.totalorder %s27, %s30
      %p39 = scmp.eq.s32.totalorder %s22, 1
      %p40 = por %p38, %p39
      %p41 = scmp.ne.s32.totalorder %s30, %s31
      %p42 = scmp.eq.s32.totalorder %s22, 0
      %p43 = por %p41, %p42
      %p44 = scmp.ne.s32.totalorder %s30, %s31
      %p45 = scmp.eq.s32.totalorder %s23, 1
      %p46 = por %p44, %p45
      %p48 = scmp.ne.s32.totalorder %s31, %s47
      %p49 = scmp.eq.s32.totalorder %s23, 0
      %p50 = por %p48, %p49
      %s52 = sadd.s32 %s51, 1
      %p55 = scmp.eq.s32.totalorder %s17, 1
      %p56 = scmp.ne.s32.totalorder %s51, %s53
      %p57 = scmp.eq.s32.totalorder %s17, 0
      %p58 = por %p56, %p57
      %p59 = scmp.ne.s32.totalorder %s51, %s53
      %p60 = scmp.eq.s32.totalorder %s22, 1
      %p61 = por %p59, %p60
      %p62 = scmp.ne.s32.totalorder %s53, %s54
      %p63 = scmp.eq.s32.totalorder %s22, 0
      %p64 = por %p62, %p63
      %p65 = scmp.ne.s32.totalorder %s53, %s54
      %p66 = scmp.eq.s32.totalorder %s23, 1
      %p67 = por %p65, %p66
      %p69 = scmp.ne.s32.totalorder %s54, %s68
      %p70 = scmp.eq.s32.totalorder %s23, 0
      %p71 = por %p69, %p70
      %s73 = sadd.s32 %s72, 1
      %p76 = scmp.eq.s32.totalorder %s17, 1
      %p77 = scmp.ne.s32.totalorder %s72, %s74
      %p78 = scmp.eq.s32.totalorder %s17, 0
      %p79 = por %p77, %p78
      %p80 = scmp.ne.s32.totalorder %s72, %s74
      %p81 = scmp.eq.s32.totalorder %s22, 1
      %p82 = por %p80, %p81
      %p83 = scmp.ne.s32.totalorder %s74, %s75
      %p84 = scmp.eq.s32.totalorder %s22, 0
      %p85 = por %p83, %p84
      %p86 = scmp.ne.s32.totalorder %s74, %s75
      %p87 = scmp.eq.s32.totalorder %s23, 1
      %p88 = por %p86, %p87
      %p90 = scmp.ne.s32.totalorder %s75, %s89
      %p91 = scmp.eq.s32.totalorder %s23, 0
      %p92 = por %p90, %p91
      %s94 = sadd.s32 %s93, 1
      %p97 = scmp.eq.s32.totalorder %s17, 1
      %p98 = scmp.ne.s32.totalorder %s93, %s95
      %p99 = scmp.eq.s32.totalorder %s17, 0
      %p100 = por %p98, %p99
      %p101 = scmp.ne.s32.totalorder %s93, %s95
      %p102 = scmp.eq.s32.totalorder %s22, 1
      %p103 = por %p101, %p102
      %p104 = scmp.ne.s32.totalorder %s95, %s96
      %p105 = scmp.eq.s32.totalorder %s22, 0
      %p106 = por %p104, %p105
      %p107 = scmp.ne.s32.totalorder %s95, %s96
      %p108 = scmp.eq.s32.totalorder %s23, 1
      %p109 = por %p107, %p108
      %p111 = scmp.ne.s32.totalorder %s96, %s110
      %p112 = scmp.eq.s32.totalorder %s23, 0
      %p113 = por %p111, %p112
      %s115 = sadd.s32 %s114, 1
      %p118 = scmp.eq.s32.totalorder %s17, 1
      %p119 = scmp.ne.s32.totalorder %s114, %s116
      %p120 = scmp.eq.s32.totalorder %s17, 0
      %p121 = por %p119, %p120
      %p122 = scmp.ne.s32.totalorder %s114, %s116
      %p123 = scmp.eq.s32.totalorder %s22, 1
      %p124 = por %p122, %p123
      %p125 = scmp.ne.s32.totalorder %s116, %s117
      %p126 = scmp.eq.s32.totalorder %s22, 0
      %p127 = por %p125, %p126
      %p128 = scmp.ne.s32.totalorder %s116, %s117
      %p129 = scmp.eq.s32.totalorder %s23, 1
      %p130 = por %p128, %p129
      %p132 = scmp.ne.s32.totalorder %s117, %s131
      %p133 = scmp.eq.s32.totalorder %s23, 0
      %p134 = por %p132, %p133
      %s135 = ssub.s32 %s17, %s24
      %p136 = scmp.eq.s32.totalorder %s135, 0
      %s138 = sadd.s32 %s137, 1
      %s139 = scalar_select %p136, %s137, %s138
      %p142 = pneg %p136
      %p143 = scmp.eq.s32.totalorder %s17, 1
      %p144 = por %p142, %p143
      %p145 = scmp.ne.s32.totalorder %s137, %s140
      %p146 = scmp.eq.s32.totalorder %s17, 0
      %p147 = por %p145, %p146
      %p148 = scmp.ne.s32.totalorder %s137, %s140
      %p149 = scmp.eq.s32.totalorder %s22, 1
      %p150 = por %p148, %p149
      %p151 = scmp.ne.s32.totalorder %s140, %s141
      %p152 = scmp.eq.s32.totalorder %s22, 0
      %p153 = por %p151, %p152
      %p154 = scmp.ne.s32.totalorder %s140, %s141
      %p155 = scmp.eq.s32.totalorder %s23, 1
      %p156 = por %p154, %p155
      %p158 = scmp.ne.s32.totalorder %s141, %s157
      %p159 = scmp.eq.s32.totalorder %s23, 0
      %p160 = por %p158, %p159
      %p161 = scmp.le.s32.totalorder 1, %s17
      %p162 = scmp.lt.s32.totalorder %s17, 3
      %p163 = pnand %p161, %p162
      %p164 = pneg %p163
      // Predicated region
      $region9: #{tpu_custom_call.1} parent=5 // pred_check
        _
      $region10: #{tpu_custom_call.1} parent=5 // pred_check_branch
        %166 = sbr.rel (%p163) target = $region12
      $region11: #{tpu_custom_call.1} parent=5 // pred_region
        %s167 = ssub.s32 %s17, 1
        // Predicated region
        $region13: #{tpu_custom_call.1} parent=11 // pred_check
          %p168 = pneg %p64
        $region14: #{tpu_custom_call.1} parent=11 // pred_check_branch
          %170 = sbr.rel (%p168) target = $region16
        $region15: #{tpu_custom_call.1} parent=11 // pred_region
          _
        $region16: #{tpu_custom_call.1} parent=11 // pred_fallthru
          _
        // Predicated region
        $region17: #{tpu_custom_call.1} parent=11 // pred_check
          %p171 = pneg %p85
        $region18: #{tpu_custom_call.1} parent=11 // pred_check_branch
          %173 = sbr.rel (%p171) target = $region20
        $region19: #{tpu_custom_call.1} parent=11 // pred_region
          _
        $region20: #{tpu_custom_call.1} parent=11 // pred_fallthru
          _
        // Predicated region
        $region21: #{tpu_custom_call.1} parent=11 // pred_check
          %p174 = pneg %p106
        $region22: #{tpu_custom_call.1} parent=11 // pred_check_branch
          %176 = sbr.rel (%p174) target = $region24
        $region23: #{tpu_custom_call.1} parent=11 // pred_region
          _
        $region24: #{tpu_custom_call.1} parent=11 // pred_fallthru
          _
        // Predicated region
        $region25: #{tpu_custom_call.1} parent=11 // pred_check
          %p177 = pneg %p127
        $region26: #{tpu_custom_call.1} parent=11 // pred_check_branch
          %179 = sbr.rel (%p177) target = $region28
        $region27: #{tpu_custom_call.1} parent=11 // pred_region
          _
        $region28: #{tpu_custom_call.1} parent=11 // pred_fallthru
          _
      $region12: #{tpu_custom_call.1} parent=5 // pred_fallthru
        _
      %p180 = scmp.lt.s32.totalorder %s17, 2
      // Predicated region
      $region29: #{tpu_custom_call.1} parent=5 // pred_check
        %p181 = pneg %p180
      $region30: #{tpu_custom_call.1} parent=5 // pred_check_branch
        %183 = sbr.rel (%p181) target = $region32
      $region31: #{tpu_custom_call.1} parent=5 // pred_region
        // Predicated region
        $region33: #{tpu_custom_call.1} parent=31 // pred_check
          %p184 = pneg %p37
        $region34: #{tpu_custom_call.1} parent=31 // pred_check_branch
          %186 = sbr.rel (%p184) target = $region36
        $region35: #{tpu_custom_call.1} parent=31 // pred_region
          %s187 = sand.u32 %s27, 1
          %s188 = scalar_lea.sflag [#allocation3], %s187
          %s189 = sand.u32 %s27, 1
          %s190 = smul.addr %s189, 512
          %s191 = scalar_lea.vmem [#allocation2], %s190
          %s192 = smul.u32 4, %s17
          %s194 = ssub.s32 8192, 8192
          %195 = vsyncadd %s188, %s194
          %s196 = smul.addr %s192, 16
          %s197 = smul.addr %s196, 128
          %s198 = scalar_lea.hbm %s0, %s197
          %s199 = sshll.u32 %s191, 4
          %s200 = int_to_ptr.vmem [resolvable:$true] %s199
          %205 = dma.hbm_to_vmem [thread:$0]  %s198, 8192, %s200, %s188, 256, 256, 16
        $region36: #{tpu_custom_call.1} parent=31 // pred_fallthru
          _
      $region32: #{tpu_custom_call.1} parent=5 // pred_fallthru
        _
      %p206 = scmp.le.s32.totalorder 1, %s17
      %p207 = scmp.lt.s32.totalorder %s17, 3
      %p208 = pnand %p206, %p207
      %p209 = pneg %p208
      // Predicated region
      $region37: #{tpu_custom_call.1} parent=5 // pred_check
        _
      $region38: #{tpu_custom_call.1} parent=5 // pred_check_branch
        %211 = sbr.rel (%p208) target = $region40
      $region39: #{tpu_custom_call.1} parent=5 // pred_region
        %s212 = ssub.s32 %s17, 1
        %s213 = sand.u32 %s30, 1
        %s214 = scalar_lea.sflag [#allocation3], %s213
        %s215 = sand.u32 %s30, 1
        %s216 = smul.addr %s215, 512
        %s217 = scalar_lea.vmem [#allocation2], %s216
        // Predicated region
        $region41: #{tpu_custom_call.1} parent=39 // pred_check
          %p218 = pneg %p43
        $region42: #{tpu_custom_call.1} parent=39 // pred_check_branch
          %220 = sbr.rel (%p218) target = $region44
        $region43: #{tpu_custom_call.1} parent=39 // pred_region
          %221 = dma.done %s214, 8192
        $region44: #{tpu_custom_call.1} parent=39 // pred_fallthru
          _
        %s222 = sand.u32 %s30, 1
        %s223 = scalar_lea.sflag [#allocation3], %s222
        %s224 = sand.u32 %s30, 1
        %s225 = smul.addr %s224, 512
        %s226 = scalar_lea.vmem [#allocation2], %s225
        %p227 = pneg %p43
        %p228 = pneg %p40
        %p229 = pneg %p64
        %p230 = pneg %p61
        %p231 = pneg %p85
        %p232 = pneg %p82
        %p233 = pneg %p106
        %p234 = pneg %p103
        %p235 = pneg %p127
        %p236 = pneg %p124
        %p237 = pneg %p153
        %p238 = pneg %p150
        %s239 = sand.u32 %s140, 1
        %s240 = scalar_lea.sflag [#allocation4], %s239
        %s241 = sand.u32 %s140, 1
        %s242 = smul.addr %s241, 512
        %s243 = scalar_lea.vmem [#allocation5], %s242
        %s244 = smul.u32 4, %s22
        %s245 = smul.u32 4, %s22
        %v246 = vld [vmem:[%s217] sm:$0xff]
        %v247 = vld [vmem:[%s217 + $0x8] sm:$0xff]
        %v248 = vld [vmem:[%s217 + $0x10] sm:$0xff]
        %v249 = vld [vmem:[%s217 + $0x18] sm:$0xff]
        %v250 = vld [vmem:[%s217 + $0x20] sm:$0xff]
        %v251 = vld [vmem:[%s217 + $0x28] sm:$0xff]
        %v252 = vld [vmem:[%s217 + $0x30] sm:$0xff]
        %v253 = vld [vmem:[%s217 + $0x38] sm:$0xff]
        %v254 = vld [vmem:[%s217 + $0x40] sm:$0xff]
        %v255 = vld [vmem:[%s217 + $0x48] sm:$0xff]
        %v256 = vld [vmem:[%s217 + $0x50] sm:$0xff]
        %v257 = vld [vmem:[%s217 + $0x58] sm:$0xff]
        %v258 = vld [vmem:[%s217 + $0x60] sm:$0xff]
        %v259 = vld [vmem:[%s217 + $0x68] sm:$0xff]
        %v260 = vld [vmem:[%s217 + $0x70] sm:$0xff]
        %v261 = vld [vmem:[%s217 + $0x78] sm:$0xff]
        %v262 = vld [vmem:[%s217 + $0x80] sm:$0xff]
        %v263 = vld [vmem:[%s217 + $0x88] sm:$0xff]
        %v264 = vld [vmem:[%s217 + $0x90] sm:$0xff]
        %v265 = vld [vmem:[%s217 + $0x98] sm:$0xff]
        %v266 = vld [vmem:[%s217 + $0xa0] sm:$0xff]
        %v267 = vld [vmem:[%s217 + $0xa8] sm:$0xff]
        %v268 = vld [vmem:[%s217 + $0xb0] sm:$0xff]
        %v269 = vld [vmem:[%s217 + $0xb8] sm:$0xff]
        %v270 = vld [vmem:[%s217 + $0xc0] sm:$0xff]
        %v271 = vld [vmem:[%s217 + $0xc8] sm:$0xff]
        %v272 = vld [vmem:[%s217 + $0xd0] sm:$0xff]
        %v273 = vld [vmem:[%s217 + $0xd8] sm:$0xff]
        %v274 = vld [vmem:[%s217 + $0xe0] sm:$0xff]
        %v275 = vld [vmem:[%s217 + $0xe8] sm:$0xff]
        %v276 = vld [vmem:[%s217 + $0xf0] sm:$0xff]
        %v277 = vld [vmem:[%s217 + $0xf8] sm:$0xff]
        %v278 = vld [vmem:[%s217 + $0x100] sm:$0xff]
        %v279 = vld [vmem:[%s217 + $0x108] sm:$0xff]
        %v280 = vld [vmem:[%s217 + $0x110] sm:$0xff]
        %v281 = vld [vmem:[%s217 + $0x118] sm:$0xff]
        %v282 = vld [vmem:[%s217 + $0x120] sm:$0xff]
        %v283 = vld [vmem:[%s217 + $0x128] sm:$0xff]
        %v284 = vld [vmem:[%s217 + $0x130] sm:$0xff]
        %v285 = vld [vmem:[%s217 + $0x138] sm:$0xff]
        %v286 = vld [vmem:[%s217 + $0x140] sm:$0xff]
        %v287 = vld [vmem:[%s217 + $0x148] sm:$0xff]
        %v288 = vld [vmem:[%s217 + $0x150] sm:$0xff]
        %v289 = vld [vmem:[%s217 + $0x158] sm:$0xff]
        %v290 = vld [vmem:[%s217 + $0x160] sm:$0xff]
        %v291 = vld [vmem:[%s217 + $0x168] sm:$0xff]
        %v292 = vld [vmem:[%s217 + $0x170] sm:$0xff]
        %v293 = vld [vmem:[%s217 + $0x178] sm:$0xff]
        %v294 = vld [vmem:[%s217 + $0x180] sm:$0xff]
        %v295 = vld [vmem:[%s217 + $0x188] sm:$0xff]
        %v296 = vld [vmem:[%s217 + $0x190] sm:$0xff]
        %v297 = vld [vmem:[%s217 + $0x198] sm:$0xff]
        %v298 = vld [vmem:[%s217 + $0x1a0] sm:$0xff]
        %v299 = vld [vmem:[%s217 + $0x1a8] sm:$0xff]
        %v300 = vld [vmem:[%s217 + $0x1b0] sm:$0xff]
        %v301 = vld [vmem:[%s217 + $0x1b8] sm:$0xff]
        %v302 = vld [vmem:[%s217 + $0x1c0] sm:$0xff]
        %v303 = vld [vmem:[%s217 + $0x1c8] sm:$0xff]
        %v304 = vld [vmem:[%s217 + $0x1d0] sm:$0xff]
        %v305 = vld [vmem:[%s217 + $0x1d8] sm:$0xff]
        %v306 = vld [vmem:[%s217 + $0x1e0] sm:$0xff]
        %v307 = vld [vmem:[%s217 + $0x1e8] sm:$0xff]
        %v308 = vld [vmem:[%s217 + $0x1f0] sm:$0xff]
        %v309 = vld [vmem:[%s217 + $0x1f8] sm:$0xff]
        %310 = vmatprep.subr.mxu0 0.0
        %311 = vmatpush1.msra.mxu0 0.00390625
        %312 = vmatprep.subr.mxu0 0.0
        %313 = vmatpush1.msra.mxu0 0.00390625
        %314 = vmatprep.subr.mxu0 0.0
        %315 = vmatpush1.msra.mxu0 0.00390625
        %316 = vmatprep.subr.mxu0 0.0
        %317 = vmatpush1.msra.mxu0 0.00390625
        %318 = vmatprep.subr.mxu0 0.0
        %319 = vmatpush1.msra.mxu0 0.00390625
        %320 = vmatprep.subr.mxu0 0.0
        %321 = vmatpush1.msra.mxu0 0.00390625
        %322 = vmatprep.subr.mxu0 0.0
        %323 = vmatpush1.msra.mxu0 0.00390625
        %324 = vmatprep.subr.mxu0 0.0
        %325 = vmatpush1.msra.mxu0 0.00390625
        %326 = vmatprep.subr.mxu0 0.0
        %327 = vmatpush1.msra.mxu0 0.00390625
        %328 = vmatprep.subr.mxu0 0.0
        %329 = vmatpush1.msra.mxu0 0.00390625
        %330 = vmatprep.subr.mxu0 0.0
        %331 = vmatpush1.msra.mxu0 0.00390625
        %332 = vmatprep.subr.mxu0 0.0
        %333 = vmatpush1.msra.mxu0 0.00390625
        %334 = vmatprep.subr.mxu0 0.0
        %335 = vmatpush1.msra.mxu0 0.00390625
        %336 = vmatprep.subr.mxu0 0.0
        %337 = vmatpush1.msra.mxu0 0.00390625
        %338 = vmatprep.subr.mxu0 0.0
        %339 = vmatpush1.msra.mxu0 0.00390625
        %340 = vmatprep.subr.mxu0 0.0
        %341 = vmatpush1.msra.mxu0 0.00390625
        %342 = vmatprep.subr.mxu0 0.0
        %343 = vmatpush2.msra.mxu0 0.00390625
        %344 = vmatprep.subr.mxu0 0.0
        %345 = vmatpush2.msra.mxu0 0.00390625
        %346 = vmatprep.subr.mxu0 0.0
        %347 = vmatpush2.msra.mxu0 0.00390625
        %348 = vmatprep.subr.mxu0 0.0
        %349 = vmatpush2.msra.mxu0 0.00390625
        %350 = vmatprep.subr.mxu0 0.0
        %351 = vmatpush2.msra.mxu0 0.00390625
        %352 = vmatprep.subr.mxu0 0.0
        %353 = vmatpush2.msra.mxu0 0.00390625
        %354 = vmatprep.subr.mxu0 0.0
        %355 = vmatpush2.msra.mxu0 0.00390625
        %356 = vmatprep.subr.mxu0 0.0
        %357 = vmatpush2.msra.mxu0 0.00390625
        %358 = vmatprep.subr.mxu0 0.0
        %359 = vmatpush2.msra.mxu0 0.00390625
        %360 = vmatprep.subr.mxu0 0.0
        %361 = vmatpush2.msra.mxu0 0.00390625
        %362 = vmatprep.subr.mxu0 0.0
        %363 = vmatpush2.msra.mxu0 0.00390625
        %364 = vmatprep.subr.mxu0 0.0
        %365 = vmatpush2.msra.mxu0 0.00390625
        %366 = vmatprep.subr.mxu0 0.0
        %367 = vmatpush2.msra.mxu0 0.00390625
        %368 = vmatprep.subr.mxu0 0.0
        %369 = vmatpush2.msra.mxu0 0.00390625
        %370 = vmatprep.subr.mxu0 0.0
        %371 = vmatpush2.msra.mxu0 0.00390625
        %372 = vmatprep.subr.mxu0 0.0
        %373 = vmatpush2.msra.mxu0 0.00390625
        %374 = vmatprep.mubr.f32.mxu0 %v247
        %375 = vmatmul.mubr.f32.gmra.mxu0 %v246
        %v376 = vpop.f32.mrf.mxu0
        %v377 = vadd.f32 0.0, %v376
        %v378 = vpop.f32.mrf.mxu0
        %379 = vmatprep.mubr.f32.mxu0 %v249
        %380 = vmatmul.mubr.f32.gmra.mxu0 %v248
        %v381 = vpop.f32.mrf.mxu0
        %v382 = vadd.f32 0.0, %v381
        %v383 = vpop.f32.mrf.mxu0
        %384 = vmatprep.mubr.f32.mxu0 %v251
        %385 = vmatmul.mubr.f32.gmra.mxu0 %v250
        %v386 = vpop.f32.mrf.mxu0
        %v387 = vadd.f32 0.0, %v386
        %v388 = vpop.f32.mrf.mxu0
        %389 = vmatprep.mubr.f32.mxu0 %v253
        %390 = vmatmul.mubr.f32.gmra.mxu0 %v252
        %v391 = vpop.f32.mrf.mxu0
        %v392 = vadd.f32 0.0, %v391
        %v393 = vpop.f32.mrf.mxu0
        %394 = vmatprep.mubr.f32.mxu0 %v255
        %395 = vmatmul.mubr.f32.gmra.mxu0 %v254
        %v396 = vpop.f32.mrf.mxu0
        %v397 = vadd.f32 0.0, %v396
        %v398 = vpop.f32.mrf.mxu0
        %399 = vmatprep.mubr.f32.mxu0 %v257
        %400 = vmatmul.mubr.f32.gmra.mxu0 %v256
        %v401 = vpop.f32.mrf.mxu0
        %v402 = vadd.f32 0.0, %v401
        %v403 = vpop.f32.mrf.mxu0
        %404 = vmatprep.mubr.f32.mxu0 %v259
        %405 = vmatmul.mubr.f32.gmra.mxu0 %v258
        %v406 = vpop.f32.mrf.mxu0
        %v407 = vadd.f32 0.0, %v406
        %v408 = vpop.f32.mrf.mxu0
        %409 = vmatprep.mubr.f32.mxu0 %v261
        %410 = vmatmul.mubr.f32.gmra.mxu0 %v260
        %v411 = vpop.f32.mrf.mxu0
        %v412 = vadd.f32 0.0, %v411
        %v413 = vpop.f32.mrf.mxu0
        %414 = vdwg.mxu0
        %415 = vmatprep.subr.mxu0 0.0
        %416 = vmatpush1.msra.mxu0 0.00390625
        %417 = vmatprep.subr.mxu0 0.0
        %418 = vmatpush1.msra.mxu0 0.00390625
        %419 = vmatprep.subr.mxu0 0.0
        %420 = vmatpush1.msra.mxu0 0.00390625
        %421 = vmatprep.subr.mxu0 0.0
        %422 = vmatpush1.msra.mxu0 0.00390625
        %423 = vmatprep.subr.mxu0 0.0
        %424 = vmatpush1.msra.mxu0 0.00390625
        %425 = vmatprep.subr.mxu0 0.0
        %426 = vmatpush1.msra.mxu0 0.00390625
        %427 = vmatprep.subr.mxu0 0.0
        %428 = vmatpush1.msra.mxu0 0.00390625
        %429 = vmatprep.subr.mxu0 0.0
        %430 = vmatpush1.msra.mxu0 0.00390625
        %431 = vmatprep.subr.mxu0 0.0
        %432 = vmatpush1.msra.mxu0 0.00390625
        %433 = vmatprep.subr.mxu0 0.0
        %434 = vmatpush1.msra.mxu0 0.00390625
        %435 = vmatprep.subr.mxu0 0.0
        %436 = vmatpush1.msra.mxu0 0.00390625
        %437 = vmatprep.subr.mxu0 0.0
        %438 = vmatpush1.msra.mxu0 0.00390625
        %439 = vmatprep.subr.mxu0 0.0
        %440 = vmatpush1.msra.mxu0 0.00390625
        %441 = vmatprep.subr.mxu0 0.0
        %442 = vmatpush1.msra.mxu0 0.00390625
        %443 = vmatprep.subr.mxu0 0.0
        %444 = vmatpush1.msra.mxu0 0.00390625
        %445 = vmatprep.subr.mxu0 0.0
        %446 = vmatpush1.msra.mxu0 0.00390625
        %447 = vmatprep.subr.mxu0 0.0
        %448 = vmatpush2.msra.mxu0 0.00390625
        %449 = vmatprep.subr.mxu0 0.0
        %450 = vmatpush2.msra.mxu0 0.00390625
        %451 = vmatprep.subr.mxu0 0.0
        %452 = vmatpush2.msra.mxu0 0.00390625
        %453 = vmatprep.subr.mxu0 0.0
        %454 = vmatpush2.msra.mxu0 0.00390625
        %455 = vmatprep.subr.mxu0 0.0
        %456 = vmatpush2.msra.mxu0 0.00390625
        %457 = vmatprep.subr.mxu0 0.0
        %458 = vmatpush2.msra.mxu0 0.00390625
        %459 = vmatprep.subr.mxu0 0.0
        %460 = vmatpush2.msra.mxu0 0.00390625
        %461 = vmatprep.subr.mxu0 0.0
        %462 = vmatpush2.msra.mxu0 0.00390625
        %463 = vmatprep.subr.mxu0 0.0
        %464 = vmatpush2.msra.mxu0 0.00390625
        %465 = vmatprep.subr.mxu0 0.0
        %466 = vmatpush2.msra.mxu0 0.00390625
        %467 = vmatprep.subr.mxu0 0.0
        %468 = vmatpush2.msra.mxu0 0.00390625
        %469 = vmatprep.subr.mxu0 0.0
        %470 = vmatpush2.msra.mxu0 0.00390625
        %471 = vmatprep.subr.mxu0 0.0
        %472 = vmatpush2.msra.mxu0 0.00390625
        %473 = vmatprep.subr.mxu0 0.0
        %474 = vmatpush2.msra.mxu0 0.00390625
        %475 = vmatprep.subr.mxu0 0.0
        %476 = vmatpush2.msra.mxu0 0.00390625
        %477 = vmatprep.subr.mxu0 0.0
        %478 = vmatpush2.msra.mxu0 0.00390625
        %479 = vmatprep.mubr.f32.mxu0 %v263
        %480 = vmatmul.mubr.f32.gmra.mxu0 %v262
        %v481 = vpop.f32.mrf.mxu0
        %v482 = vadd.f32 0.0, %v481
        %v483 = vpop.f32.mrf.mxu0
        %484 = vmatprep.mubr.f32.mxu0 %v265
        %485 = vmatmul.mubr.f32.gmra.mxu0 %v264
        %v486 = vpop.f32.mrf.mxu0
        %v487 = vadd.f32 0.0, %v486
        %v488 = vpop.f32.mrf.mxu0
        %489 = vmatprep.mubr.f32.mxu0 %v267
        %490 = vmatmul.mubr.f32.gmra.mxu0 %v266
        %v491 = vpop.f32.mrf.mxu0
        %v492 = vadd.f32 0.0, %v491
        %v493 = vpop.f32.mrf.mxu0
        %494 = vmatprep.mubr.f32.mxu0 %v269
        %495 = vmatmul.mubr.f32.gmra.mxu0 %v268
        %v496 = vpop.f32.mrf.mxu0
        %v497 = vadd.f32 0.0, %v496
        %v498 = vpop.f32.mrf.mxu0
        %499 = vmatprep.mubr.f32.mxu0 %v271
        %500 = vmatmul.mubr.f32.gmra.mxu0 %v270
        %v501 = vpop.f32.mrf.mxu0
        %v502 = vadd.f32 0.0, %v501
        %v503 = vpop.f32.mrf.mxu0
        %504 = vmatprep.mubr.f32.mxu0 %v273
        %505 = vmatmul.mubr.f32.gmra.mxu0 %v272
        %v506 = vpop.f32.mrf.mxu0
        %v507 = vadd.f32 0.0, %v506
        %v508 = vpop.f32.mrf.mxu0
        %509 = vmatprep.mubr.f32.mxu0 %v275
        %510 = vmatmul.mubr.f32.gmra.mxu0 %v274
        %v511 = vpop.f32.mrf.mxu0
        %v512 = vadd.f32 0.0, %v511
        %v513 = vpop.f32.mrf.mxu0
        %514 = vmatprep.mubr.f32.mxu0 %v277
        %515 = vmatmul.mubr.f32.gmra.mxu0 %v276
        %v516 = vpop.f32.mrf.mxu0
        %v517 = vadd.f32 0.0, %v516
        %v518 = vpop.f32.mrf.mxu0
        %519 = vdwg.mxu0
        %520 = vmatprep.subr.mxu0 0.0
        %521 = vmatpush1.msra.mxu0 0.00390625
        %522 = vmatprep.subr.mxu0 0.0
        %523 = vmatpush1.msra.mxu0 0.00390625
        %524 = vmatprep.subr.mxu0 0.0
        %525 = vmatpush1.msra.mxu0 0.00390625
        %526 = vmatprep.subr.mxu0 0.0
        %527 = vmatpush1.msra.mxu0 0.00390625
        %528 = vmatprep.subr.mxu0 0.0
        %529 = vmatpush1.msra.mxu0 0.00390625
        %530 = vmatprep.subr.mxu0 0.0
        %531 = vmatpush1.msra.mxu0 0.00390625
        %532 = vmatprep.subr.mxu0 0.0
        %533 = vmatpush1.msra.mxu0 0.00390625
        %534 = vmatprep.subr.mxu0 0.0
        %535 = vmatpush1.msra.mxu0 0.00390625
        %536 = vmatprep.subr.mxu0 0.0
        %537 = vmatpush1.msra.mxu0 0.00390625
        %538 = vmatprep.subr.mxu0 0.0
        %539 = vmatpush1.msra.mxu0 0.00390625
        %540 = vmatprep.subr.mxu0 0.0
        %541 = vmatpush1.msra.mxu0 0.00390625
        %542 = vmatprep.subr.mxu0 0.0
        %543 = vmatpush1.msra.mxu0 0.00390625
        %544 = vmatprep.subr.mxu0 0.0
        %545 = vmatpush1.msra.mxu0 0.00390625
        %546 = vmatprep.subr.mxu0 0.0
        %547 = vmatpush1.msra.mxu0 0.00390625
        %548 = vmatprep.subr.mxu0 0.0
        %549 = vmatpush1.msra.mxu0 0.00390625
        %550 = vmatprep.subr.mxu0 0.0
        %551 = vmatpush1.msra.mxu0 0.00390625
        %552 = vmatprep.subr.mxu0 0.0
        %553 = vmatpush2.msra.mxu0 0.00390625
        %554 = vmatprep.subr.mxu0 0.0
        %555 = vmatpush2.msra.mxu0 0.00390625
        %556 = vmatprep.subr.mxu0 0.0
        %557 = vmatpush2.msra.mxu0 0.00390625
        %558 = vmatprep.subr.mxu0 0.0
        %559 = vmatpush2.msra.mxu0 0.00390625
        %560 = vmatprep.subr.mxu0 0.0
        %561 = vmatpush2.msra.mxu0 0.00390625
        %562 = vmatprep.subr.mxu0 0.0
        %563 = vmatpush2.msra.mxu0 0.00390625
        %564 = vmatprep.subr.mxu0 0.0
        %565 = vmatpush2.msra.mxu0 0.00390625
        %566 = vmatprep.subr.mxu0 0.0
        %567 = vmatpush2.msra.mxu0 0.00390625
        %568 = vmatprep.subr.mxu0 0.0
        %569 = vmatpush2.msra.mxu0 0.00390625
        %570 = vmatprep.subr.mxu0 0.0
        %571 = vmatpush2.msra.mxu0 0.00390625
        %572 = vmatprep.subr.mxu0 0.0
        %573 = vmatpush2.msra.mxu0 0.00390625
        %574 = vmatprep.subr.mxu0 0.0
        %575 = vmatpush2.msra.mxu0 0.00390625
        %576 = vmatprep.subr.mxu0 0.0
        %577 = vmatpush2.msra.mxu0 0.00390625
        %578 = vmatprep.subr.mxu0 0.0
        %579 = vmatpush2.msra.mxu0 0.00390625
        %580 = vmatprep.subr.mxu0 0.0
        %581 = vmatpush2.msra.mxu0 0.00390625
        %582 = vmatprep.subr.mxu0 0.0
        %583 = vmatpush2.msra.mxu0 0.00390625
        %584 = vmatprep.mubr.f32.mxu0 %v279
        %585 = vmatmul.mubr.f32.gmra.mxu0 %v278
        %v586 = vpop.f32.mrf.mxu0
        %v587 = vadd.f32 0.0, %v586
        %v588 = vpop.f32.mrf.mxu0
        %589 = vmatprep.mubr.f32.mxu0 %v281
        %590 = vmatmul.mubr.f32.gmra.mxu0 %v280
        %v591 = vpop.f32.mrf.mxu0
        %v592 = vadd.f32 0.0, %v591
        %v593 = vpop.f32.mrf.mxu0
        %594 = vmatprep.mubr.f32.mxu0 %v283
        %595 = vmatmul.mubr.f32.gmra.mxu0 %v282
        %v596 = vpop.f32.mrf.mxu0
        %v597 = vadd.f32 0.0, %v596
        %v598 = vpop.f32.mrf.mxu0
        %599 = vmatprep.mubr.f32.mxu0 %v285
        %600 = vmatmul.mubr.f32.gmra.mxu0 %v284
        %v601 = vpop.f32.mrf.mxu0
        %v602 = vadd.f32 0.0, %v601
        %v603 = vpop.f32.mrf.mxu0
        %604 = vmatprep.mubr.f32.mxu0 %v287
        %605 = vmatmul.mubr.f32.gmra.mxu0 %v286
        %v606 = vpop.f32.mrf.mxu0
        %v607 = vadd.f32 0.0, %v606
        %v608 = vpop.f32.mrf.mxu0
        %609 = vmatprep.mubr.f32.mxu0 %v289
        %610 = vmatmul.mubr.f32.gmra.mxu0 %v288
        %v611 = vpop.f32.mrf.mxu0
        %v612 = vadd.f32 0.0, %v611
        %v613 = vpop.f32.mrf.mxu0
        %614 = vmatprep.mubr.f32.mxu0 %v291
        %615 = vmatmul.mubr.f32.gmra.mxu0 %v290
        %v616 = vpop.f32.mrf.mxu0
        %v617 = vadd.f32 0.0, %v616
        %v618 = vpop.f32.mrf.mxu0
        %619 = vmatprep.mubr.f32.mxu0 %v293
        %620 = vmatmul.mubr.f32.gmra.mxu0 %v292
        %v621 = vpop.f32.mrf.mxu0
        %v622 = vadd.f32 0.0, %v621
        %v623 = vpop.f32.mrf.mxu0
        %624 = vdwg.mxu0
        %625 = vmatprep.subr.mxu0 0.0
        %626 = vmatpush1.msra.mxu0 0.00390625
        %627 = vmatprep.subr.mxu0 0.0
        %628 = vmatpush1.msra.mxu0 0.00390625
        %629 = vmatprep.subr.mxu0 0.0
        %630 = vmatpush1.msra.mxu0 0.00390625
        %631 = vmatprep.subr.mxu0 0.0
        %632 = vmatpush1.msra.mxu0 0.00390625
        %633 = vmatprep.subr.mxu0 0.0
        %634 = vmatpush1.msra.mxu0 0.00390625
        %635 = vmatprep.subr.mxu0 0.0
        %636 = vmatpush1.msra.mxu0 0.00390625
        %637 = vmatprep.subr.mxu0 0.0
        %638 = vmatpush1.msra.mxu0 0.00390625
        %639 = vmatprep.subr.mxu0 0.0
        %640 = vmatpush1.msra.mxu0 0.00390625
        %641 = vmatprep.subr.mxu0 0.0
        %642 = vmatpush1.msra.mxu0 0.00390625
        %643 = vmatprep.subr.mxu0 0.0
        %644 = vmatpush1.msra.mxu0 0.00390625
        %645 = vmatprep.subr.mxu0 0.0
        %646 = vmatpush1.msra.mxu0 0.00390625
        %647 = vmatprep.subr.mxu0 0.0
        %648 = vmatpush1.msra.mxu0 0.00390625
        %649 = vmatprep.subr.mxu0 0.0
        %650 = vmatpush1.msra.mxu0 0.00390625
        %651 = vmatprep.subr.mxu0 0.0
        %652 = vmatpush1.msra.mxu0 0.00390625
        %653 = vmatprep.subr.mxu0 0.0
        %654 = vmatpush1.msra.mxu0 0.00390625
        %655 = vmatprep.subr.mxu0 0.0
        %656 = vmatpush1.msra.mxu0 0.00390625
        %657 = vmatprep.subr.mxu0 0.0
        %658 = vmatpush2.msra.mxu0 0.00390625
        %659 = vmatprep.subr.mxu0 0.0
        %660 = vmatpush2.msra.mxu0 0.00390625
        %661 = vmatprep.subr.mxu0 0.0
        %662 = vmatpush2.msra.mxu0 0.00390625
        %663 = vmatprep.subr.mxu0 0.0
        %664 = vmatpush2.msra.mxu0 0.00390625
        %665 = vmatprep.subr.mxu0 0.0
        %666 = vmatpush2.msra.mxu0 0.00390625
        %667 = vmatprep.subr.mxu0 0.0
        %668 = vmatpush2.msra.mxu0 0.00390625
        %669 = vmatprep.subr.mxu0 0.0
        %670 = vmatpush2.msra.mxu0 0.00390625
        %671 = vmatprep.subr.mxu0 0.0
        %672 = vmatpush2.msra.mxu0 0.00390625
        %673 = vmatprep.subr.mxu0 0.0
        %674 = vmatpush2.msra.mxu0 0.00390625
        %675 = vmatprep.subr.mxu0 0.0
        %676 = vmatpush2.msra.mxu0 0.00390625
        %677 = vmatprep.subr.mxu0 0.0
        %678 = vmatpush2.msra.mxu0 0.00390625
        %679 = vmatprep.subr.mxu0 0.0
        %680 = vmatpush2.msra.mxu0 0.00390625
        %681 = vmatprep.subr.mxu0 0.0
        %682 = vmatpush2.msra.mxu0 0.00390625
        %683 = vmatprep.subr.mxu0 0.0
        %684 = vmatpush2.msra.mxu0 0.00390625
        %685 = vmatprep.subr.mxu0 0.0
        %686 = vmatpush2.msra.mxu0 0.00390625
        %687 = vmatprep.subr.mxu0 0.0
        %688 = vmatpush2.msra.mxu0 0.00390625
        %689 = vmatprep.mubr.f32.mxu0 %v295
        %690 = vmatmul.mubr.f32.gmra.mxu0 %v294
        %v691 = vpop.f32.mrf.mxu0
        %v692 = vadd.f32 0.0, %v691
        %v693 = vpop.f32.mrf.mxu0
        %694 = vmatprep.mubr.f32.mxu0 %v297
        %695 = vmatmul.mubr.f32.gmra.mxu0 %v296
        %v696 = vpop.f32.mrf.mxu0
        %v697 = vadd.f32 0.0, %v696
        %v698 = vpop.f32.mrf.mxu0
        %699 = vmatprep.mubr.f32.mxu0 %v299
        %700 = vmatmul.mubr.f32.gmra.mxu0 %v298
        %v701 = vpop.f32.mrf.mxu0
        %v702 = vadd.f32 0.0, %v701
        %v703 = vpop.f32.mrf.mxu0
        %704 = vmatprep.mubr.f32.mxu0 %v301
        %705 = vmatmul.mubr.f32.gmra.mxu0 %v300
        %v706 = vpop.f32.mrf.mxu0
        %v707 = vadd.f32 0.0, %v706
        %v708 = vpop.f32.mrf.mxu0
        %709 = vmatprep.mubr.f32.mxu0 %v303
        %710 = vmatmul.mubr.f32.gmra.mxu0 %v302
        %v711 = vpop.f32.mrf.mxu0
        %v712 = vadd.f32 0.0, %v711
        %v713 = vpop.f32.mrf.mxu0
        %714 = vmatprep.mubr.f32.mxu0 %v305
        %715 = vmatmul.mubr.f32.gmra.mxu0 %v304
        %v716 = vpop.f32.mrf.mxu0
        %v717 = vadd.f32 0.0, %v716
        %v718 = vpop.f32.mrf.mxu0
        %719 = vmatprep.mubr.f32.mxu0 %v307
        %720 = vmatmul.mubr.f32.gmra.mxu0 %v306
        %v721 = vpop.f32.mrf.mxu0
        %v722 = vadd.f32 0.0, %v721
        %v723 = vpop.f32.mrf.mxu0
        %724 = vmatprep.mubr.f32.mxu0 %v309
        %725 = vmatmul.mubr.f32.gmra.mxu0 %v308
        %v726 = vpop.f32.mrf.mxu0
        %v727 = vadd.f32 0.0, %v726
        %v728 = vpop.f32.mrf.mxu0
        %729 = vdwg.mxu0
        %v730 = vld [vmem:[%s1] sm:$0xf]
        %v731 = vld [vmem:[%s2] sm:$0xf]
        %vm732 = vcmask 523264
        %v734 = vsel %vm732, %v730, 0
        %736 = vmatprep.subr.mxu0 0.0
        %737 = vmatpush1.msra.mxu0 0.0
        %738 = vmatprep.subr.mxu0 0.0
        %739 = vmatpush1.msra.mxu0 0.0
        %740 = vmatprep.subr.mxu0 0.0
        %741 = vmatpush1.msra.mxu0 0.0
        %742 = vmatprep.subr.mxu0 0.0
        %743 = vmatpush1.msra.mxu0 0.0
        %744 = vmatprep.subr.mxu0 0.0
        %745 = vmatpush1.msra.mxu0 0.0
        %746 = vmatprep.subr.mxu0 0.0
        %747 = vmatpush1.msra.mxu0 0.0
        %748 = vmatprep.subr.mxu0 0.0
        %749 = vmatpush1.msra.mxu0 0.0
        %750 = vmatprep.subr.mxu0 0.0
        %751 = vmatpush1.msra.mxu0 0.0
        %752 = vmatprep.subr.mxu0 0.0
        %753 = vmatpush1.msra.mxu0 %v412
        %754 = vmatprep.subr.mxu0 0.0
        %755 = vmatpush1.msra.mxu0 %v407
        %756 = vmatprep.subr.mxu0 0.0
        %757 = vmatpush1.msra.mxu0 %v402
        %758 = vmatprep.subr.mxu0 0.0
        %759 = vmatpush1.msra.mxu0 %v397
        %760 = vmatprep.subr.mxu0 0.0
        %761 = vmatpush1.msra.mxu0 %v392
        %762 = vmatprep.subr.mxu0 0.0
        %763 = vmatpush1.msra.mxu0 %v387
        %764 = vmatprep.subr.mxu0 0.0
        %765 = vmatpush1.msra.mxu0 %v382
        %766 = vmatprep.subr.mxu0 0.0
        %767 = vmatpush1.msra.mxu0 %v377
        %768 = vmatprep.subr.mxu0 0.0
        %769 = vmatpush2.msra.mxu0 0.0
        %770 = vmatprep.subr.mxu0 0.0
        %771 = vmatpush2.msra.mxu0 0.0
        %772 = vmatprep.subr.mxu0 0.0
        %773 = vmatpush2.msra.mxu0 0.0
        %774 = vmatprep.subr.mxu0 0.0
        %775 = vmatpush2.msra.mxu0 0.0
        %776 = vmatprep.subr.mxu0 0.0
        %777 = vmatpush2.msra.mxu0 0.0
        %778 = vmatprep.subr.mxu0 0.0
        %779 = vmatpush2.msra.mxu0 0.0
        %780 = vmatprep.subr.mxu0 0.0
        %781 = vmatpush2.msra.mxu0 0.0
        %782 = vmatprep.subr.mxu0 0.0
        %783 = vmatpush2.msra.mxu0 0.0
        %784 = vmatprep.subr.mxu0 0.0
        %785 = vmatpush2.msra.mxu0 0.0
        %786 = vmatprep.subr.mxu0 0.0
        %787 = vmatpush2.msra.mxu0 0.0
        %788 = vmatprep.subr.mxu0 0.0
        %789 = vmatpush2.msra.mxu0 0.0
        %790 = vmatprep.subr.mxu0 0.0
        %791 = vmatpush2.msra.mxu0 0.0
        %792 = vmatprep.subr.mxu0 0.0
        %793 = vmatpush2.msra.mxu0 0.0
        %794 = vmatprep.subr.mxu0 0.0
        %795 = vmatpush2.msra.mxu0 0.0
        %796 = vmatprep.subr.mxu0 0.0
        %797 = vmatpush2.msra.mxu0 0.0
        %798 = vmatprep.subr.mxu0 0.0
        %799 = vmatpush2.msra.mxu0 0.0
        %800 = vmatprep.mubr.f32.mxu0 0.0
        %801 = vmatmul.mubr.f32.gmra.mxu0 %v734
        %v802 = vpop.f32.mrf.mxu0
        %v803 = vadd.f32 %v731, %v802
        %v804 = vpop.f32.mrf.mxu0
        %805 = vdwg.mxu0
        %806 = vmatprep.subr.mxu0 0.0
        %807 = vmatpush1.msra.mxu0 0.0
        %808 = vmatprep.subr.mxu0 0.0
        %809 = vmatpush1.msra.mxu0 0.0
        %810 = vmatprep.subr.mxu0 0.0
        %811 = vmatpush1.msra.mxu0 0.0
        %812 = vmatprep.subr.mxu0 0.0
        %813 = vmatpush1.msra.mxu0 0.0
        %814 = vmatprep.subr.mxu0 0.0
        %815 = vmatpush1.msra.mxu0 0.0
        %816 = vmatprep.subr.mxu0 0.0
        %817 = vmatpush1.msra.mxu0 0.0
        %818 = vmatprep.subr.mxu0 0.0
        %819 = vmatpush1.msra.mxu0 0.0
        %820 = vmatprep.subr.mxu0 0.0
        %821 = vmatpush1.msra.mxu0 0.0
        %822 = vmatprep.subr.mxu0 0.0
        %823 = vmatpush1.msra.mxu0 %v517
        %824 = vmatprep.subr.mxu0 0.0
        %825 = vmatpush1.msra.mxu0 %v512
        %826 = vmatprep.subr.mxu0 0.0
        %827 = vmatpush1.msra.mxu0 %v507
        %828 = vmatprep.subr.mxu0 0.0
        %829 = vmatpush1.msra.mxu0 %v502
        %830 = vmatprep.subr.mxu0 0.0
        %831 = vmatpush1.msra.mxu0 %v497
        %832 = vmatprep.subr.mxu0 0.0
        %833 = vmatpush1.msra.mxu0 %v492
        %834 = vmatprep.subr.mxu0 0.0
        %835 = vmatpush1.msra.mxu0 %v487
        %836 = vmatprep.subr.mxu0 0.0
        %837 = vmatpush1.msra.mxu0 %v482
        %838 = vmatprep.subr.mxu0 0.0
        %839 = vmatpush2.msra.mxu0 0.0
        %840 = vmatprep.subr.mxu0 0.0
        %841 = vmatpush2.msra.mxu0 0.0
        %842 = vmatprep.subr.mxu0 0.0
        %843 = vmatpush2.msra.mxu0 0.0
        %844 = vmatprep.subr.mxu0 0.0
        %845 = vmatpush2.msra.mxu0 0.0
        %846 = vmatprep.subr.mxu0 0.0
        %847 = vmatpush2.msra.mxu0 0.0
        %848 = vmatprep.subr.mxu0 0.0
        %849 = vmatpush2.msra.mxu0 0.0
        %850 = vmatprep.subr.mxu0 0.0
        %851 = vmatpush2.msra.mxu0 0.0
        %852 = vmatprep.subr.mxu0 0.0
        %853 = vmatpush2.msra.mxu0 0.0
        %854 = vmatprep.subr.mxu0 0.0
        %855 = vmatpush2.msra.mxu0 0.0
        %856 = vmatprep.subr.mxu0 0.0
        %857 = vmatpush2.msra.mxu0 0.0
        %858 = vmatprep.subr.mxu0 0.0
        %859 = vmatpush2.msra.mxu0 0.0
        %860 = vmatprep.subr.mxu0 0.0
        %861 = vmatpush2.msra.mxu0 0.0
        %862 = vmatprep.subr.mxu0 0.0
        %863 = vmatpush2.msra.mxu0 0.0
        %864 = vmatprep.subr.mxu0 0.0
        %865 = vmatpush2.msra.mxu0 0.0
        %866 = vmatprep.subr.mxu0 0.0
        %867 = vmatpush2.msra.mxu0 0.0
        %868 = vmatprep.subr.mxu0 0.0
        %869 = vmatpush2.msra.mxu0 0.0
        %870 = vmatprep.mubr.f32.mxu0 0.0
        %871 = vmatmul.mubr.f32.gmra.mxu0 %v734
        %v872 = vpop.f32.mrf.mxu0
        %v873 = vadd.f32 %v731, %v872
        %v874 = vpop.f32.mrf.mxu0
        %875 = vdwg.mxu0
        %876 = vmatprep.subr.mxu0 0.0
        %877 = vmatpush1.msra.mxu0 0.0
        %878 = vmatprep.subr.mxu0 0.0
        %879 = vmatpush1.msra.mxu0 0.0
        %880 = vmatprep.subr.mxu0 0.0
        %881 = vmatpush1.msra.mxu0 0.0
        %882 = vmatprep.subr.mxu0 0.0
        %883 = vmatpush1.msra.mxu0 0.0
        %884 = vmatprep.subr.mxu0 0.0
        %885 = vmatpush1.msra.mxu0 0.0
        %886 = vmatprep.subr.mxu0 0.0
        %887 = vmatpush1.msra.mxu0 0.0
        %888 = vmatprep.subr.mxu0 0.0
        %889 = vmatpush1.msra.mxu0 0.0
        %890 = vmatprep.subr.mxu0 0.0
        %891 = vmatpush1.msra.mxu0 0.0
        %892 = vmatprep.subr.mxu0 0.0
        %893 = vmatpush1.msra.mxu0 %v622
        %894 = vmatprep.subr.mxu0 0.0
        %895 = vmatpush1.msra.mxu0 %v617
        %896 = vmatprep.subr.mxu0 0.0
        %897 = vmatpush1.msra.mxu0 %v612
        %898 = vmatprep.subr.mxu0 0.0
        %899 = vmatpush1.msra.mxu0 %v607
        %900 = vmatprep.subr.mxu0 0.0
        %901 = vmatpush1.msra.mxu0 %v602
        %902 = vmatprep.subr.mxu0 0.0
        %903 = vmatpush1.msra.mxu0 %v597
        %904 = vmatprep.subr.mxu0 0.0
        %905 = vmatpush1.msra.mxu0 %v592
        %906 = vmatprep.subr.mxu0 0.0
        %907 = vmatpush1.msra.mxu0 %v587
        %908 = vmatprep.subr.mxu0 0.0
        %909 = vmatpush2.msra.mxu0 0.0
        %910 = vmatprep.subr.mxu0 0.0
        %911 = vmatpush2.msra.mxu0 0.0
        %912 = vmatprep.subr.mxu0 0.0
        %913 = vmatpush2.msra.mxu0 0.0
        %914 = vmatprep.subr.mxu0 0.0
        %915 = vmatpush2.msra.mxu0 0.0
        %916 = vmatprep.subr.mxu0 0.0
        %917 = vmatpush2.msra.mxu0 0.0
        %918 = vmatprep.subr.mxu0 0.0
        %919 = vmatpush2.msra.mxu0 0.0
        %920 = vmatprep.subr.mxu0 0.0
        %921 = vmatpush2.msra.mxu0 0.0
        %922 = vmatprep.subr.mxu0 0.0
        %923 = vmatpush2.msra.mxu0 0.0
        %924 = vmatprep.subr.mxu0 0.0
        %925 = vmatpush2.msra.mxu0 0.0
        %926 = vmatprep.subr.mxu0 0.0
        %927 = vmatpush2.msra.mxu0 0.0
        %928 = vmatprep.subr.mxu0 0.0
        %929 = vmatpush2.msra.mxu0 0.0
        %930 = vmatprep.subr.mxu0 0.0
        %931 = vmatpush2.msra.mxu0 0.0
        %932 = vmatprep.subr.mxu0 0.0
        %933 = vmatpush2.msra.mxu0 0.0
        %934 = vmatprep.subr.mxu0 0.0
        %935 = vmatpush2.msra.mxu0 0.0
        %936 = vmatprep.subr.mxu0 0.0
        %937 = vmatpush2.msra.mxu0 0.0
        %938 = vmatprep.subr.mxu0 0.0
        %939 = vmatpush2.msra.mxu0 0.0
        %940 = vmatprep.mubr.f32.mxu0 0.0
        %941 = vmatmul.mubr.f32.gmra.mxu0 %v734
        %v942 = vpop.f32.mrf.mxu0
        %v943 = vadd.f32 %v731, %v942
        %v944 = vpop.f32.mrf.mxu0
        %945 = vdwg.mxu0
        %946 = vmatprep.subr.mxu0 0.0
        %947 = vmatpush1.msra.mxu0 0.0
        %948 = vmatprep.subr.mxu0 0.0
        %949 = vmatpush1.msra.mxu0 0.0
        %950 = vmatprep.subr.mxu0 0.0
        %951 = vmatpush1.msra.mxu0 0.0
        %952 = vmatprep.subr.mxu0 0.0
        %953 = vmatpush1.msra.mxu0 0.0
        %954 = vmatprep.subr.mxu0 0.0
        %955 = vmatpush1.msra.mxu0 0.0
        %956 = vmatprep.subr.mxu0 0.0
        %957 = vmatpush1.msra.mxu0 0.0
        %958 = vmatprep.subr.mxu0 0.0
        %959 = vmatpush1.msra.mxu0 0.0
        %960 = vmatprep.subr.mxu0 0.0
        %961 = vmatpush1.msra.mxu0 0.0
        %962 = vmatprep.subr.mxu0 0.0
        %963 = vmatpush1.msra.mxu0 %v727
        %964 = vmatprep.subr.mxu0 0.0
        %965 = vmatpush1.msra.mxu0 %v722
        %966 = vmatprep.subr.mxu0 0.0
        %967 = vmatpush1.msra.mxu0 %v717
        %968 = vmatprep.subr.mxu0 0.0
        %969 = vmatpush1.msra.mxu0 %v712
        %970 = vmatprep.subr.mxu0 0.0
        %971 = vmatpush1.msra.mxu0 %v707
        %972 = vmatprep.subr.mxu0 0.0
        %973 = vmatpush1.msra.mxu0 %v702
        %974 = vmatprep.subr.mxu0 0.0
        %975 = vmatpush1.msra.mxu0 %v697
        %976 = vmatprep.subr.mxu0 0.0
        %977 = vmatpush1.msra.mxu0 %v692
        %978 = vmatprep.subr.mxu0 0.0
        %979 = vmatpush2.msra.mxu0 0.0
        %980 = vmatprep.subr.mxu0 0.0
        %981 = vmatpush2.msra.mxu0 0.0
        %982 = vmatprep.subr.mxu0 0.0
        %983 = vmatpush2.msra.mxu0 0.0
        %984 = vmatprep.subr.mxu0 0.0
        %985 = vmatpush2.msra.mxu0 0.0
        %986 = vmatprep.subr.mxu0 0.0
        %987 = vmatpush2.msra.mxu0 0.0
        %988 = vmatprep.subr.mxu0 0.0
        %989 = vmatpush2.msra.mxu0 0.0
        %990 = vmatprep.subr.mxu0 0.0
        %991 = vmatpush2.msra.mxu0 0.0
        %992 = vmatprep.subr.mxu0 0.0
        %993 = vmatpush2.msra.mxu0 0.0
        %994 = vmatprep.subr.mxu0 0.0
        %995 = vmatpush2.msra.mxu0 0.0
        %996 = vmatprep.subr.mxu0 0.0
        %997 = vmatpush2.msra.mxu0 0.0
        %998 = vmatprep.subr.mxu0 0.0
        %999 = vmatpush2.msra.mxu0 0.0
        %1000 = vmatprep.subr.mxu0 0.0
        %1001 = vmatpush2.msra.mxu0 0.0
        %1002 = vmatprep.subr.mxu0 0.0
        %1003 = vmatpush2.msra.mxu0 0.0
        %1004 = vmatprep.subr.mxu0 0.0
        %1005 = vmatpush2.msra.mxu0 0.0
        %1006 = vmatprep.subr.mxu0 0.0
        %1007 = vmatpush2.msra.mxu0 0.0
        %1008 = vmatprep.subr.mxu0 0.0
        %1009 = vmatpush2.msra.mxu0 0.0
        %1010 = vmatprep.mubr.f32.mxu0 0.0
        %1011 = vmatmul.mubr.f32.gmra.mxu0 %v734
        %v1012 = vpop.f32.mrf.mxu0
        %v1013 = vadd.f32 %v731, %v1012
        %v1014 = vpop.f32.mrf.mxu0
        %1015 = vdwg.mxu0
        %v1016 = vmax.f32 %v803, 0.0
        %v1017 = vmax.f32 %v873, 0.0
        %v1018 = vmax.f32 %v943, 0.0
        %v1019 = vmax.f32 %v1013, 0.0
        %v1020 = vld [vmem:[%s3] sm:$0xff]
        %v1021 = vld [vmem:[%s3 + $0x8] sm:$0xff]
        %v1022 = vld [vmem:[%s3 + $0x10] sm:$0xff]
        %v1023 = vld [vmem:[%s3 + $0x18] sm:$0xff]
        %v1024 = vld [vmem:[%s3 + $0x20] sm:$0xff]
        %v1025 = vld [vmem:[%s3 + $0x28] sm:$0xff]
        %v1026 = vld [vmem:[%s3 + $0x30] sm:$0xff]
        %v1027 = vld [vmem:[%s3 + $0x38] sm:$0xff]
        %v1028 = vld [vmem:[%s4] sm:$0xff]
        %v1029 = vld [vmem:[%s4 + $0x8] sm:$0xff]
        %v1030 = vld [vmem:[%s4 + $0x10] sm:$0xff]
        %v1031 = vld [vmem:[%s4 + $0x18] sm:$0xff]
        %v1032 = vld [vmem:[%s4 + $0x20] sm:$0xff]
        %v1033 = vld [vmem:[%s4 + $0x28] sm:$0xff]
        %v1034 = vld [vmem:[%s4 + $0x30] sm:$0xff]
        %v1035 = vld [vmem:[%s4 + $0x38] sm:$0xff]
        %vm1036 = vcmask 31744
        %v1038 = vsel %vm1036, %v1020, 0
        %v1041 = vsel %vm1036, %v1021, 0
        %v1044 = vsel %vm1036, %v1022, 0
        %v1047 = vsel %vm1036, %v1023, 0
        %v1050 = vsel %vm1036, %v1024, 0
        %v1053 = vsel %vm1036, %v1025, 0
        %v1056 = vsel %vm1036, %v1026, 0
        %v1059 = vsel %vm1036, %v1027, 0
        %vm1061 = vcmask 1043456
        %v1063 = vsel %vm1061, %v1016, 0
        %1065 = vmatprep.subr.mxu0 0.0
        %1066 = vmatpush1.msra.mxu0 0.0
        %1067 = vmatprep.subr.mxu0 0.0
        %1068 = vmatpush1.msra.mxu0 0.0
        %1069 = vmatprep.subr.mxu0 0.0
        %1070 = vmatpush1.msra.mxu0 0.0
        %1071 = vmatprep.subr.mxu0 0.0
        %1072 = vmatpush1.msra.mxu0 0.0
        %1073 = vmatprep.subr.mxu0 0.0
        %1074 = vmatpush1.msra.mxu0 0.0
        %1075 = vmatprep.subr.mxu0 0.0
        %1076 = vmatpush1.msra.mxu0 0.0
        %1077 = vmatprep.subr.mxu0 0.0
        %1078 = vmatpush1.msra.mxu0 0.0
        %1079 = vmatprep.subr.mxu0 0.0
        %1080 = vmatpush1.msra.mxu0 0.0
        %1081 = vmatprep.subr.mxu0 0.0
        %1082 = vmatpush1.msra.mxu0 0.0
        %1083 = vmatprep.subr.mxu0 0.0
        %1084 = vmatpush1.msra.mxu0 0.0
        %1085 = vmatprep.subr.mxu0 0.0
        %1086 = vmatpush1.msra.mxu0 0.0
        %1087 = vmatprep.subr.mxu0 0.0
        %1088 = vmatpush1.msra.mxu0 0.0
        %1089 = vmatprep.subr.mxu0 0.0
        %1090 = vmatpush1.msra.mxu0 0.0
        %1091 = vmatprep.subr.mxu0 0.0
        %1092 = vmatpush1.msra.mxu0 0.0
        %1093 = vmatprep.subr.mxu0 0.0
        %1094 = vmatpush1.msra.mxu0 0.0
        %1095 = vmatprep.subr.mxu0 0.0
        %1096 = vmatpush1.msra.mxu0 %v1063
        %1097 = vmatprep.subr.mxu0 0.0
        %1098 = vmatpush2.msra.mxu0 0.0
        %1099 = vmatprep.subr.mxu0 0.0
        %1100 = vmatpush2.msra.mxu0 0.0
        %1101 = vmatprep.subr.mxu0 0.0
        %1102 = vmatpush2.msra.mxu0 0.0
        %1103 = vmatprep.subr.mxu0 0.0
        %1104 = vmatpush2.msra.mxu0 0.0
        %1105 = vmatprep.subr.mxu0 0.0
        %1106 = vmatpush2.msra.mxu0 0.0
        %1107 = vmatprep.subr.mxu0 0.0
        %1108 = vmatpush2.msra.mxu0 0.0
        %1109 = vmatprep.subr.mxu0 0.0
        %1110 = vmatpush2.msra.mxu0 0.0
        %1111 = vmatprep.subr.mxu0 0.0
        %1112 = vmatpush2.msra.mxu0 0.0
        %1113 = vmatprep.subr.mxu0 0.0
        %1114 = vmatpush2.msra.mxu0 0.0
        %1115 = vmatprep.subr.mxu0 0.0
        %1116 = vmatpush2.msra.mxu0 0.0
        %1117 = vmatprep.subr.mxu0 0.0
        %1118 = vmatpush2.msra.mxu0 0.0
        %1119 = vmatprep.subr.mxu0 0.0
        %1120 = vmatpush2.msra.mxu0 0.0
        %1121 = vmatprep.subr.mxu0 0.0
        %1122 = vmatpush2.msra.mxu0 0.0
        %1123 = vmatprep.subr.mxu0 0.0
        %1124 = vmatpush2.msra.mxu0 0.0
        %1125 = vmatprep.subr.mxu0 0.0
        %1126 = vmatpush2.msra.mxu0 0.0
        %1127 = vmatprep.subr.mxu0 0.0
        %1128 = vmatpush2.msra.mxu0 0.0
        %1129 = vmatprep.mubr.f32.mxu0 0.0
        %1130 = vmatmul.mubr.f32.gmra.mxu0 %v1038
        %v1131 = vpop.f32.mrf.mxu0
        %v1132 = vadd.f32 %v1028, %v1131
        %v1133 = vpop.f32.mrf.mxu0
        %1134 = vmatprep.mubr.f32.mxu0 0.0
        %1135 = vmatmul.mubr.f32.gmra.mxu0 %v1041
        %v1136 = vpop.f32.mrf.mxu0
        %v1137 = vadd.f32 %v1029, %v1136
        %v1138 = vpop.f32.mrf.mxu0
        %1139 = vmatprep.mubr.f32.mxu0 0.0
        %1140 = vmatmul.mubr.f32.gmra.mxu0 %v1044
        %v1141 = vpop.f32.mrf.mxu0
        %v1142 = vadd.f32 %v1030, %v1141
        %v1143 = vpop.f32.mrf.mxu0
        %1144 = vmatprep.mubr.f32.mxu0 0.0
        %1145 = vmatmul.mubr.f32.gmra.mxu0 %v1047
        %v1146 = vpop.f32.mrf.mxu0
        %v1147 = vadd.f32 %v1031, %v1146
        %v1148 = vpop.f32.mrf.mxu0
        %1149 = vmatprep.mubr.f32.mxu0 0.0
        %1150 = vmatmul.mubr.f32.gmra.mxu0 %v1050
        %v1151 = vpop.f32.mrf.mxu0
        %v1152 = vadd.f32 %v1032, %v1151
        %v1153 = vpop.f32.mrf.mxu0
        %1154 = vmatprep.mubr.f32.mxu0 0.0
        %1155 = vmatmul.mubr.f32.gmra.mxu0 %v1053
        %v1156 = vpop.f32.mrf.mxu0
        %v1157 = vadd.f32 %v1033, %v1156
        %v1158 = vpop.f32.mrf.mxu0
        %1159 = vmatprep.mubr.f32.mxu0 0.0
        %1160 = vmatmul.mubr.f32.gmra.mxu0 %v1056
        %v1161 = vpop.f32.mrf.mxu0
        %v1162 = vadd.f32 %v1034, %v1161
        %v1163 = vpop.f32.mrf.mxu0
        %1164 = vmatprep.mubr.f32.mxu0 0.0
        %1165 = vmatmul.mubr.f32.gmra.mxu0 %v1059
        %v1166 = vpop.f32.mrf.mxu0
        %v1167 = vadd.f32 %v1035, %v1166
        %v1168 = vpop.f32.mrf.mxu0
        %1169 = vdwg.mxu0
        %v1171 = vsel %vm1061, %v1017, 0
        %1173 = vmatprep.subr.mxu0 0.0
        %1174 = vmatpush1.msra.mxu0 0.0
        %1175 = vmatprep.subr.mxu0 0.0
        %1176 = vmatpush1.msra.mxu0 0.0
        %1177 = vmatprep.subr.mxu0 0.0
        %1178 = vmatpush1.msra.mxu0 0.0
        %1179 = vmatprep.subr.mxu0 0.0
        %1180 = vmatpush1.msra.mxu0 0.0
        %1181 = vmatprep.subr.mxu0 0.0
        %1182 = vmatpush1.msra.mxu0 0.0
        %1183 = vmatprep.subr.mxu0 0.0
        %1184 = vmatpush1.msra.mxu0 0.0
        %1185 = vmatprep.subr.mxu0 0.0
        %1186 = vmatpush1.msra.mxu0 0.0
        %1187 = vmatprep.subr.mxu0 0.0
        %1188 = vmatpush1.msra.mxu0 0.0
        %1189 = vmatprep.subr.mxu0 0.0
        %1190 = vmatpush1.msra.mxu0 0.0
        %1191 = vmatprep.subr.mxu0 0.0
        %1192 = vmatpush1.msra.mxu0 0.0
        %1193 = vmatprep.subr.mxu0 0.0
        %1194 = vmatpush1.msra.mxu0 0.0
        %1195 = vmatprep.subr.mxu0 0.0
        %1196 = vmatpush1.msra.mxu0 0.0
        %1197 = vmatprep.subr.mxu0 0.0
        %1198 = vmatpush1.msra.mxu0 0.0
        %1199 = vmatprep.subr.mxu0 0.0
        %1200 = vmatpush1.msra.mxu0 0.0
        %1201 = vmatprep.subr.mxu0 0.0
        %1202 = vmatpush1.msra.mxu0 0.0
        %1203 = vmatprep.subr.mxu0 0.0
        %1204 = vmatpush1.msra.mxu0 %v1171
        %1205 = vmatprep.subr.mxu0 0.0
        %1206 = vmatpush2.msra.mxu0 0.0
        %1207 = vmatprep.subr.mxu0 0.0
        %1208 = vmatpush2.msra.mxu0 0.0
        %1209 = vmatprep.subr.mxu0 0.0
        %1210 = vmatpush2.msra.mxu0 0.0
        %1211 = vmatprep.subr.mxu0 0.0
        %1212 = vmatpush2.msra.mxu0 0.0
        %1213 = vmatprep.subr.mxu0 0.0
        %1214 = vmatpush2.msra.mxu0 0.0
        %1215 = vmatprep.subr.mxu0 0.0
        %1216 = vmatpush2.msra.mxu0 0.0
        %1217 = vmatprep.subr.mxu0 0.0
        %1218 = vmatpush2.msra.mxu0 0.0
        %1219 = vmatprep.subr.mxu0 0.0
        %1220 = vmatpush2.msra.mxu0 0.0
        %1221 = vmatprep.subr.mxu0 0.0
        %1222 = vmatpush2.msra.mxu0 0.0
        %1223 = vmatprep.subr.mxu0 0.0
        %1224 = vmatpush2.msra.mxu0 0.0
        %1225 = vmatprep.subr.mxu0 0.0
        %1226 = vmatpush2.msra.mxu0 0.0
        %1227 = vmatprep.subr.mxu0 0.0
        %1228 = vmatpush2.msra.mxu0 0.0
        %1229 = vmatprep.subr.mxu0 0.0
        %1230 = vmatpush2.msra.mxu0 0.0
        %1231 = vmatprep.subr.mxu0 0.0
        %1232 = vmatpush2.msra.mxu0 0.0
        %1233 = vmatprep.subr.mxu0 0.0
        %1234 = vmatpush2.msra.mxu0 0.0
        %1235 = vmatprep.subr.mxu0 0.0
        %1236 = vmatpush2.msra.mxu0 0.0
        %1237 = vmatprep.mubr.f32.mxu0 0.0
        %1238 = vmatmul.mubr.f32.gmra.mxu0 %v1038
        %v1239 = vpop.f32.mrf.mxu0
        %v1240 = vadd.f32 %v1028, %v1239
        %v1241 = vpop.f32.mrf.mxu0
        %1242 = vmatprep.mubr.f32.mxu0 0.0
        %1243 = vmatmul.mubr.f32.gmra.mxu0 %v1041
        %v1244 = vpop.f32.mrf.mxu0
        %v1245 = vadd.f32 %v1029, %v1244
        %v1246 = vpop.f32.mrf.mxu0
        %1247 = vmatprep.mubr.f32.mxu0 0.0
        %1248 = vmatmul.mubr.f32.gmra.mxu0 %v1044
        %v1249 = vpop.f32.mrf.mxu0
        %v1250 = vadd.f32 %v1030, %v1249
        %v1251 = vpop.f32.mrf.mxu0
        %1252 = vmatprep.mubr.f32.mxu0 0.0
        %1253 = vmatmul.mubr.f32.gmra.mxu0 %v1047
        %v1254 = vpop.f32.mrf.mxu0
        %v1255 = vadd.f32 %v1031, %v1254
        %v1256 = vpop.f32.mrf.mxu0
        %1257 = vmatprep.mubr.f32.mxu0 0.0
        %1258 = vmatmul.mubr.f32.gmra.mxu0 %v1050
        %v1259 = vpop.f32.mrf.mxu0
        %v1260 = vadd.f32 %v1032, %v1259
        %v1261 = vpop.f32.mrf.mxu0
        %1262 = vmatprep.mubr.f32.mxu0 0.0
        %1263 = vmatmul.mubr.f32.gmra.mxu0 %v1053
        %v1264 = vpop.f32.mrf.mxu0
        %v1265 = vadd.f32 %v1033, %v1264
        %v1266 = vpop.f32.mrf.mxu0
        %1267 = vmatprep.mubr.f32.mxu0 0.0
        %1268 = vmatmul.mubr.f32.gmra.mxu0 %v1056
        %v1269 = vpop.f32.mrf.mxu0
        %v1270 = vadd.f32 %v1034, %v1269
        %v1271 = vpop.f32.mrf.mxu0
        %1272 = vmatprep.mubr.f32.mxu0 0.0
        %1273 = vmatmul.mubr.f32.gmra.mxu0 %v1059
        %v1274 = vpop.f32.mrf.mxu0
        %v1275 = vadd.f32 %v1035, %v1274
        %v1276 = vpop.f32.mrf.mxu0
        %1277 = vdwg.mxu0
        %v1279 = vsel %vm1061, %v1018, 0
        %1281 = vmatprep.subr.mxu0 0.0
        %1282 = vmatpush1.msra.mxu0 0.0
        %1283 = vmatprep.subr.mxu0 0.0
        %1284 = vmatpush1.msra.mxu0 0.0
        %1285 = vmatprep.subr.mxu0 0.0
        %1286 = vmatpush1.msra.mxu0 0.0
        %1287 = vmatprep.subr.mxu0 0.0
        %1288 = vmatpush1.msra.mxu0 0.0
        %1289 = vmatprep.subr.mxu0 0.0
        %1290 = vmatpush1.msra.mxu0 0.0
        %1291 = vmatprep.subr.mxu0 0.0
        %1292 = vmatpush1.msra.mxu0 0.0
        %1293 = vmatprep.subr.mxu0 0.0
        %1294 = vmatpush1.msra.mxu0 0.0
        %1295 = vmatprep.subr.mxu0 0.0
        %1296 = vmatpush1.msra.mxu0 0.0
        %1297 = vmatprep.subr.mxu0 0.0
        %1298 = vmatpush1.msra.mxu0 0.0
        %1299 = vmatprep.subr.mxu0 0.0
        %1300 = vmatpush1.msra.mxu0 0.0
        %1301 = vmatprep.subr.mxu0 0.0
        %1302 = vmatpush1.msra.mxu0 0.0
        %1303 = vmatprep.subr.mxu0 0.0
        %1304 = vmatpush1.msra.mxu0 0.0
        %1305 = vmatprep.subr.mxu0 0.0
        %1306 = vmatpush1.msra.mxu0 0.0
        %1307 = vmatprep.subr.mxu0 0.0
        %1308 = vmatpush1.msra.mxu0 0.0
        %1309 = vmatprep.subr.mxu0 0.0
        %1310 = vmatpush1.msra.mxu0 0.0
        %1311 = vmatprep.subr.mxu0 0.0
        %1312 = vmatpush1.msra.mxu0 %v1279
        %1313 = vmatprep.subr.mxu0 0.0
        %1314 = vmatpush2.msra.mxu0 0.0
        %1315 = vmatprep.subr.mxu0 0.0
        %1316 = vmatpush2.msra.mxu0 0.0
        %1317 = vmatprep.subr.mxu0 0.0
        %1318 = vmatpush2.msra.mxu0 0.0
        %1319 = vmatprep.subr.mxu0 0.0
        %1320 = vmatpush2.msra.mxu0 0.0
        %1321 = vmatprep.subr.mxu0 0.0
        %1322 = vmatpush2.msra.mxu0 0.0
        %1323 = vmatprep.subr.mxu0 0.0
        %1324 = vmatpush2.msra.mxu0 0.0
        %1325 = vmatprep.subr.mxu0 0.0
        %1326 = vmatpush2.msra.mxu0 0.0
        %1327 = vmatprep.subr.mxu0 0.0
        %1328 = vmatpush2.msra.mxu0 0.0
        %1329 = vmatprep.subr.mxu0 0.0
        %1330 = vmatpush2.msra.mxu0 0.0
        %1331 = vmatprep.subr.mxu0 0.0
        %1332 = vmatpush2.msra.mxu0 0.0
        %1333 = vmatprep.subr.mxu0 0.0
        %1334 = vmatpush2.msra.mxu0 0.0
        %1335 = vmatprep.subr.mxu0 0.0
        %1336 = vmatpush2.msra.mxu0 0.0
        %1337 = vmatprep.subr.mxu0 0.0
        %1338 = vmatpush2.msra.mxu0 0.0
        %1339 = vmatprep.subr.mxu0 0.0
        %1340 = vmatpush2.msra.mxu0 0.0
        %1341 = vmatprep.subr.mxu0 0.0
        %1342 = vmatpush2.msra.mxu0 0.0
        %1343 = vmatprep.subr.mxu0 0.0
        %1344 = vmatpush2.msra.mxu0 0.0
        %1345 = vmatprep.mubr.f32.mxu0 0.0
        %1346 = vmatmul.mubr.f32.gmra.mxu0 %v1038
        %v1347 = vpop.f32.mrf.mxu0
        %v1348 = vadd.f32 %v1028, %v1347
        %v1349 = vpop.f32.mrf.mxu0
        %1350 = vmatprep.mubr.f32.mxu0 0.0
        %1351 = vmatmul.mubr.f32.gmra.mxu0 %v1041
        %v1352 = vpop.f32.mrf.mxu0
        %v1353 = vadd.f32 %v1029, %v1352
        %v1354 = vpop.f32.mrf.mxu0
        %1355 = vmatprep.mubr.f32.mxu0 0.0
        %1356 = vmatmul.mubr.f32.gmra.mxu0 %v1044
        %v1357 = vpop.f32.mrf.mxu0
        %v1358 = vadd.f32 %v1030, %v1357
        %v1359 = vpop.f32.mrf.mxu0
        %1360 = vmatprep.mubr.f32.mxu0 0.0
        %1361 = vmatmul.mubr.f32.gmra.mxu0 %v1047
        %v1362 = vpop.f32.mrf.mxu0
        %v1363 = vadd.f32 %v1031, %v1362
        %v1364 = vpop.f32.mrf.mxu0
        %1365 = vmatprep.mubr.f32.mxu0 0.0
        %1366 = vmatmul.mubr.f32.gmra.mxu0 %v1050
        %v1367 = vpop.f32.mrf.mxu0
        %v1368 = vadd.f32 %v1032, %v1367
        %v1369 = vpop.f32.mrf.mxu0
        %1370 = vmatprep.mubr.f32.mxu0 0.0
        %1371 = vmatmul.mubr.f32.gmra.mxu0 %v1053
        %v1372 = vpop.f32.mrf.mxu0
        %v1373 = vadd.f32 %v1033, %v1372
        %v1374 = vpop.f32.mrf.mxu0
        %1375 = vmatprep.mubr.f32.mxu0 0.0
        %1376 = vmatmul.mubr.f32.gmra.mxu0 %v1056
        %v1377 = vpop.f32.mrf.mxu0
        %v1378 = vadd.f32 %v1034, %v1377
        %v1379 = vpop.f32.mrf.mxu0
        %1380 = vmatprep.mubr.f32.mxu0 0.0
        %1381 = vmatmul.mubr.f32.gmra.mxu0 %v1059
        %v1382 = vpop.f32.mrf.mxu0
        %v1383 = vadd.f32 %v1035, %v1382
        %v1384 = vpop.f32.mrf.mxu0
        %1385 = vdwg.mxu0
        %v1387 = vsel %vm1061, %v1019, 0
        %1389 = vmatprep.subr.mxu0 0.0
        %1390 = vmatpush1.msra.mxu0 0.0
        %1391 = vmatprep.subr.mxu0 0.0
        %1392 = vmatpush1.msra.mxu0 0.0
        %1393 = vmatprep.subr.mxu0 0.0
        %1394 = vmatpush1.msra.mxu0 0.0
        %1395 = vmatprep.subr.mxu0 0.0
        %1396 = vmatpush1.msra.mxu0 0.0
        %1397 = vmatprep.subr.mxu0 0.0
        %1398 = vmatpush1.msra.mxu0 0.0
        %1399 = vmatprep.subr.mxu0 0.0
        %1400 = vmatpush1.msra.mxu0 0.0
        %1401 = vmatprep.subr.mxu0 0.0
        %1402 = vmatpush1.msra.mxu0 0.0
        %1403 = vmatprep.subr.mxu0 0.0
        %1404 = vmatpush1.msra.mxu0 0.0
        %1405 = vmatprep.subr.mxu0 0.0
        %1406 = vmatpush1.msra.mxu0 0.0
        %1407 = vmatprep.subr.mxu0 0.0
        %1408 = vmatpush1.msra.mxu0 0.0
        %1409 = vmatprep.subr.mxu0 0.0
        %1410 = vmatpush1.msra.mxu0 0.0
        %1411 = vmatprep.subr.mxu0 0.0
        %1412 = vmatpush1.msra.mxu0 0.0
        %1413 = vmatprep.subr.mxu0 0.0
        %1414 = vmatpush1.msra.mxu0 0.0
        %1415 = vmatprep.subr.mxu0 0.0
        %1416 = vmatpush1.msra.mxu0 0.0
        %1417 = vmatprep.subr.mxu0 0.0
        %1418 = vmatpush1.msra.mxu0 0.0
        %1419 = vmatprep.subr.mxu0 0.0
        %1420 = vmatpush1.msra.mxu0 %v1387
        %1421 = vmatprep.subr.mxu0 0.0
        %1422 = vmatpush2.msra.mxu0 0.0
        %1423 = vmatprep.subr.mxu0 0.0
        %1424 = vmatpush2.msra.mxu0 0.0
        %1425 = vmatprep.subr.mxu0 0.0
        %1426 = vmatpush2.msra.mxu0 0.0
        %1427 = vmatprep.subr.mxu0 0.0
        %1428 = vmatpush2.msra.mxu0 0.0
        %1429 = vmatprep.subr.mxu0 0.0
        %1430 = vmatpush2.msra.mxu0 0.0
        %1431 = vmatprep.subr.mxu0 0.0
        %1432 = vmatpush2.msra.mxu0 0.0
        %1433 = vmatprep.subr.mxu0 0.0
        %1434 = vmatpush2.msra.mxu0 0.0
        %1435 = vmatprep.subr.mxu0 0.0
        %1436 = vmatpush2.msra.mxu0 0.0
        %1437 = vmatprep.subr.mxu0 0.0
        %1438 = vmatpush2.msra.mxu0 0.0
        %1439 = vmatprep.subr.mxu0 0.0
        %1440 = vmatpush2.msra.mxu0 0.0
        %1441 = vmatprep.subr.mxu0 0.0
        %1442 = vmatpush2.msra.mxu0 0.0
        %1443 = vmatprep.subr.mxu0 0.0
        %1444 = vmatpush2.msra.mxu0 0.0
        %1445 = vmatprep.subr.mxu0 0.0
        %1446 = vmatpush2.msra.mxu0 0.0
        %1447 = vmatprep.subr.mxu0 0.0
        %1448 = vmatpush2.msra.mxu0 0.0
        %1449 = vmatprep.subr.mxu0 0.0
        %1450 = vmatpush2.msra.mxu0 0.0
        %1451 = vmatprep.subr.mxu0 0.0
        %1452 = vmatpush2.msra.mxu0 0.0
        %1453 = vmatprep.mubr.f32.mxu0 0.0
        %1454 = vmatmul.mubr.f32.gmra.mxu0 %v1038
        %v1455 = vpop.f32.mrf.mxu0
        %v1456 = vadd.f32 %v1028, %v1455
        %v1457 = vpop.f32.mrf.mxu0
        %1458 = vmatprep.mubr.f32.mxu0 0.0
        %1459 = vmatmul.mubr.f32.gmra.mxu0 %v1041
        %v1460 = vpop.f32.mrf.mxu0
        %v1461 = vadd.f32 %v1029, %v1460
        %v1462 = vpop.f32.mrf.mxu0
        %1463 = vmatprep.mubr.f32.mxu0 0.0
        %1464 = vmatmul.mubr.f32.gmra.mxu0 %v1044
        %v1465 = vpop.f32.mrf.mxu0
        %v1466 = vadd.f32 %v1030, %v1465
        %v1467 = vpop.f32.mrf.mxu0
        %1468 = vmatprep.mubr.f32.mxu0 0.0
        %1469 = vmatmul.mubr.f32.gmra.mxu0 %v1047
        %v1470 = vpop.f32.mrf.mxu0
        %v1471 = vadd.f32 %v1031, %v1470
        %v1472 = vpop.f32.mrf.mxu0
        %1473 = vmatprep.mubr.f32.mxu0 0.0
        %1474 = vmatmul.mubr.f32.gmra.mxu0 %v1050
        %v1475 = vpop.f32.mrf.mxu0
        %v1476 = vadd.f32 %v1032, %v1475
        %v1477 = vpop.f32.mrf.mxu0
        %1478 = vmatprep.mubr.f32.mxu0 0.0
        %1479 = vmatmul.mubr.f32.gmra.mxu0 %v1053
        %v1480 = vpop.f32.mrf.mxu0
        %v1481 = vadd.f32 %v1033, %v1480
        %v1482 = vpop.f32.mrf.mxu0
        %1483 = vmatprep.mubr.f32.mxu0 0.0
        %1484 = vmatmul.mubr.f32.gmra.mxu0 %v1056
        %v1485 = vpop.f32.mrf.mxu0
        %v1486 = vadd.f32 %v1034, %v1485
        %v1487 = vpop.f32.mrf.mxu0
        %1488 = vmatprep.mubr.f32.mxu0 0.0
        %1489 = vmatmul.mubr.f32.gmra.mxu0 %v1059
        %v1490 = vpop.f32.mrf.mxu0
        %v1491 = vadd.f32 %v1035, %v1490
        %v1492 = vpop.f32.mrf.mxu0
        %1493 = vdwg.mxu0
        %v1494 = vxor.u32 %v1132, 2147483648
        %v1495 = vxor.u32 %v1137, 2147483648
        %v1496 = vxor.u32 %v1142, 2147483648
        %v1497 = vxor.u32 %v1147, 2147483648
        %v1498 = vxor.u32 %v1152, 2147483648
        %v1499 = vxor.u32 %v1157, 2147483648
        %v1500 = vxor.u32 %v1162, 2147483648
        %v1501 = vxor.u32 %v1167, 2147483648
        %v1502 = vxor.u32 %v1240, 2147483648
        %v1503 = vxor.u32 %v1245, 2147483648
        %v1504 = vxor.u32 %v1250, 2147483648
        %v1505 = vxor.u32 %v1255, 2147483648
        %v1506 = vxor.u32 %v1260, 2147483648
        %v1507 = vxor.u32 %v1265, 2147483648
        %v1508 = vxor.u32 %v1270, 2147483648
        %v1509 = vxor.u32 %v1275, 2147483648
        %v1510 = vxor.u32 %v1348, 2147483648
        %v1511 = vxor.u32 %v1353, 2147483648
        %v1512 = vxor.u32 %v1358, 2147483648
        %v1513 = vxor.u32 %v1363, 2147483648
        %v1514 = vxor.u32 %v1368, 2147483648
        %v1515 = vxor.u32 %v1373, 2147483648
        %v1516 = vxor.u32 %v1378, 2147483648
        %v1517 = vxor.u32 %v1383, 2147483648
        %v1518 = vxor.u32 %v1456, 2147483648
        %v1519 = vxor.u32 %v1461, 2147483648
        %v1520 = vxor.u32 %v1466, 2147483648
        %v1521 = vxor.u32 %v1471, 2147483648
        %v1522 = vxor.u32 %v1476, 2147483648
        %v1523 = vxor.u32 %v1481, 2147483648
        %v1524 = vxor.u32 %v1486, 2147483648
        %v1525 = vxor.u32 %v1491, 2147483648
        %v1526 = vmul.f32 %v1494, 1.442695
        %v1527 = vpow.pop %v1526
        %v1528 = vmul.f32 %v1495, 1.442695
        %v1529 = vpow.pop %v1528
        %v1530 = vmul.f32 %v1496, 1.442695
        %v1531 = vpow.pop %v1530
        %v1532 = vmul.f32 %v1497, 1.442695
        %v1533 = vpow.pop %v1532
        %v1534 = vmul.f32 %v1498, 1.442695
        %v1535 = vpow.pop %v1534
        %v1536 = vmul.f32 %v1499, 1.442695
        %v1537 = vpow.pop %v1536
        %v1538 = vmul.f32 %v1500, 1.442695
        %v1539 = vpow.pop %v1538
        %v1540 = vmul.f32 %v1501, 1.442695
        %v1541 = vpow.pop %v1540
        %v1542 = vmul.f32 %v1502, 1.442695
        %v1543 = vpow.pop %v1542
        %v1544 = vmul.f32 %v1503, 1.442695
        %v1545 = vpow.pop %v1544
        %v1546 = vmul.f32 %v1504, 1.442695
        %v1547 = vpow.pop %v1546
        %v1548 = vmul.f32 %v1505, 1.442695
        %v1549 = vpow.pop %v1548
        %v1550 = vmul.f32 %v1506, 1.442695
        %v1551 = vpow.pop %v1550
        %v1552 = vmul.f32 %v1507, 1.442695
        %v1553 = vpow.pop %v1552
        %v1554 = vmul.f32 %v1508, 1.442695
        %v1555 = vpow.pop %v1554
        %v1556 = vmul.f32 %v1509, 1.442695
        %v1557 = vpow.pop %v1556
        %v1558 = vmul.f32 %v1510, 1.442695
        %v1559 = vpow.pop %v1558
        %v1560 = vmul.f32 %v1511, 1.442695
        %v1561 = vpow.pop %v1560
        %v1562 = vmul.f32 %v1512, 1.442695
        %v1563 = vpow.pop %v1562
        %v1564 = vmul.f32 %v1513, 1.442695
        %v1565 = vpow.pop %v1564
        %v1566 = vmul.f32 %v1514, 1.442695
        %v1567 = vpow.pop %v1566
        %v1568 = vmul.f32 %v1515, 1.442695
        %v1569 = vpow.pop %v1568
        %v1570 = vmul.f32 %v1516, 1.442695
        %v1571 = vpow.pop %v1570
        %v1572 = vmul.f32 %v1517, 1.442695
        %v1573 = vpow.pop %v1572
        %v1574 = vmul.f32 %v1518, 1.442695
        %v1575 = vpow.pop %v1574
        %v1576 = vmul.f32 %v1519, 1.442695
        %v1577 = vpow.pop %v1576
        %v1578 = vmul.f32 %v1520, 1.442695
        %v1579 = vpow.pop %v1578
        %v1580 = vmul.f32 %v1521, 1.442695
        %v1581 = vpow.pop %v1580
        %v1582 = vmul.f32 %v1522, 1.442695
        %v1583 = vpow.pop %v1582
        %v1584 = vmul.f32 %v1523, 1.442695
        %v1585 = vpow.pop %v1584
        %v1586 = vmul.f32 %v1524, 1.442695
        %v1587 = vpow.pop %v1586
        %v1588 = vmul.f32 %v1525, 1.442695
        %v1589 = vpow.pop %v1588
        %v1590 = vadd.f32 %v1527, 1.0
        %v1591 = vadd.f32 %v1529, 1.0
        %v1592 = vadd.f32 %v1531, 1.0
        %v1593 = vadd.f32 %v1533, 1.0
        %v1594 = vadd.f32 %v1535, 1.0
        %v1595 = vadd.f32 %v1537, 1.0
        %v1596 = vadd.f32 %v1539, 1.0
        %v1597 = vadd.f32 %v1541, 1.0
        %v1598 = vadd.f32 %v1543, 1.0
        %v1599 = vadd.f32 %v1545, 1.0
        %v1600 = vadd.f32 %v1547, 1.0
        %v1601 = vadd.f32 %v1549, 1.0
        %v1602 = vadd.f32 %v1551, 1.0
        %v1603 = vadd.f32 %v1553, 1.0
        %v1604 = vadd.f32 %v1555, 1.0
        %v1605 = vadd.f32 %v1557, 1.0
        %v1606 = vadd.f32 %v1559, 1.0
        %v1607 = vadd.f32 %v1561, 1.0
        %v1608 = vadd.f32 %v1563, 1.0
        %v1609 = vadd.f32 %v1565, 1.0
        %v1610 = vadd.f32 %v1567, 1.0
        %v1611 = vadd.f32 %v1569, 1.0
        %v1612 = vadd.f32 %v1571, 1.0
        %v1613 = vadd.f32 %v1573, 1.0
        %v1614 = vadd.f32 %v1575, 1.0
        %v1615 = vadd.f32 %v1577, 1.0
        %v1616 = vadd.f32 %v1579, 1.0
        %v1617 = vadd.f32 %v1581, 1.0
        %v1618 = vadd.f32 %v1583, 1.0
        %v1619 = vadd.f32 %v1585, 1.0
        %v1620 = vadd.f32 %v1587, 1.0
        %v1621 = vadd.f32 %v1589, 1.0
        %v1622 = vrcp.pop %v1590
        %v1623 = vmul.f32 1.0, %v1622
        %v1624 = vrcp.pop %v1591
        %v1625 = vmul.f32 1.0, %v1624
        %v1626 = vrcp.pop %v1592
        %v1627 = vmul.f32 1.0, %v1626
        %v1628 = vrcp.pop %v1593
        %v1629 = vmul.f32 1.0, %v1628
        %v1630 = vrcp.pop %v1594
        %v1631 = vmul.f32 1.0, %v1630
        %v1632 = vrcp.pop %v1595
        %v1633 = vmul.f32 1.0, %v1632
        %v1634 = vrcp.pop %v1596
        %v1635 = vmul.f32 1.0, %v1634
        %v1636 = vrcp.pop %v1597
        %v1637 = vmul.f32 1.0, %v1636
        %v1638 = vrcp.pop %v1598
        %v1639 = vmul.f32 1.0, %v1638
        %v1640 = vrcp.pop %v1599
        %v1641 = vmul.f32 1.0, %v1640
        %v1642 = vrcp.pop %v1600
        %v1643 = vmul.f32 1.0, %v1642
        %v1644 = vrcp.pop %v1601
        %v1645 = vmul.f32 1.0, %v1644
        %v1646 = vrcp.pop %v1602
        %v1647 = vmul.f32 1.0, %v1646
        %v1648 = vrcp.pop %v1603
        %v1649 = vmul.f32 1.0, %v1648
        %v1650 = vrcp.pop %v1604
        %v1651 = vmul.f32 1.0, %v1650
        %v1652 = vrcp.pop %v1605
        %v1653 = vmul.f32 1.0, %v1652
        %v1654 = vrcp.pop %v1606
        %v1655 = vmul.f32 1.0, %v1654
        %v1656 = vrcp.pop %v1607
        %v1657 = vmul.f32 1.0, %v1656
        %v1658 = vrcp.pop %v1608
        %v1659 = vmul.f32 1.0, %v1658
        %v1660 = vrcp.pop %v1609
        %v1661 = vmul.f32 1.0, %v1660
        %v1662 = vrcp.pop %v1610
        %v1663 = vmul.f32 1.0, %v1662
        %v1664 = vrcp.pop %v1611
        %v1665 = vmul.f32 1.0, %v1664
        %v1666 = vrcp.pop %v1612
        %v1667 = vmul.f32 1.0, %v1666
        %v1668 = vrcp.pop %v1613
        %v1669 = vmul.f32 1.0, %v1668
        %v1670 = vrcp.pop %v1614
        %v1671 = vmul.f32 1.0, %v1670
        %v1672 = vrcp.pop %v1615
        %v1673 = vmul.f32 1.0, %v1672
        %v1674 = vrcp.pop %v1616
        %v1675 = vmul.f32 1.0, %v1674
        %v1676 = vrcp.pop %v1617
        %v1677 = vmul.f32 1.0, %v1676
        %v1678 = vrcp.pop %v1618
        %v1679 = vmul.f32 1.0, %v1678
        %v1680 = vrcp.pop %v1619
        %v1681 = vmul.f32 1.0, %v1680
        %v1682 = vrcp.pop %v1620
        %v1683 = vmul.f32 1.0, %v1682
        %v1684 = vrcp.pop %v1621
        %v1685 = vmul.f32 1.0, %v1684
        %1687 = vset.pattern.permute.xlu0 0
        %1688 = vperm.xlu0 %1687, %v1623
        %v1689 = vpop.permute.xlu0 %1688
        %1692 = vset.pattern.permute.xlu0 0
        %1693 = vperm.xlu0 %1692, %v1625
        %v1694 = vpop.permute.xlu0 %1693
        %1697 = vset.pattern.permute.xlu0 0
        %1698 = vperm.xlu0 %1697, %v1627
        %v1699 = vpop.permute.xlu0 %1698
        %1702 = vset.pattern.permute.xlu0 0
        %1703 = vperm.xlu0 %1702, %v1629
        %v1704 = vpop.permute.xlu0 %1703
        %1707 = vset.pattern.permute.xlu0 0
        %1708 = vperm.xlu0 %1707, %v1631
        %v1709 = vpop.permute.xlu0 %1708
        %1712 = vset.pattern.permute.xlu0 0
        %1713 = vperm.xlu0 %1712, %v1633
        %v1714 = vpop.permute.xlu0 %1713
        %1717 = vset.pattern.permute.xlu0 0
        %1718 = vperm.xlu0 %1717, %v1635
        %v1719 = vpop.permute.xlu0 %1718
        %1722 = vset.pattern.permute.xlu0 0
        %1723 = vperm.xlu0 %1722, %v1637
        %v1724 = vpop.permute.xlu0 %1723
        %1727 = vset.pattern.permute.xlu0 0
        %1728 = vperm.xlu0 %1727, %v1639
        %v1729 = vpop.permute.xlu0 %1728
        %1732 = vset.pattern.permute.xlu0 0
        %1733 = vperm.xlu0 %1732, %v1641
        %v1734 = vpop.permute.xlu0 %1733
        %1737 = vset.pattern.permute.xlu0 0
        %1738 = vperm.xlu0 %1737, %v1643
        %v1739 = vpop.permute.xlu0 %1738
        %1742 = vset.pattern.permute.xlu0 0
        %1743 = vperm.xlu0 %1742, %v1645
        %v1744 = vpop.permute.xlu0 %1743
        %1747 = vset.pattern.permute.xlu0 0
        %1748 = vperm.xlu0 %1747, %v1647
        %v1749 = vpop.permute.xlu0 %1748
        %1752 = vset.pattern.permute.xlu0 0
        %1753 = vperm.xlu0 %1752, %v1649
        %v1754 = vpop.permute.xlu0 %1753
        %1757 = vset.pattern.permute.xlu0 0
        %1758 = vperm.xlu0 %1757, %v1651
        %v1759 = vpop.permute.xlu0 %1758
        %1762 = vset.pattern.permute.xlu0 0
        %1763 = vperm.xlu0 %1762, %v1653
        %v1764 = vpop.permute.xlu0 %1763
        %1767 = vset.pattern.permute.xlu0 0
        %1768 = vperm.xlu0 %1767, %v1655
        %v1769 = vpop.permute.xlu0 %1768
        %1772 = vset.pattern.permute.xlu0 0
        %1773 = vperm.xlu0 %1772, %v1657
        %v1774 = vpop.permute.xlu0 %1773
        %1777 = vset.pattern.permute.xlu0 0
        %1778 = vperm.xlu0 %1777, %v1659
        %v1779 = vpop.permute.xlu0 %1778
        %1782 = vset.pattern.permute.xlu0 0
        %1783 = vperm.xlu0 %1782, %v1661
        %v1784 = vpop.permute.xlu0 %1783
        %1787 = vset.pattern.permute.xlu0 0
        %1788 = vperm.xlu0 %1787, %v1663
        %v1789 = vpop.permute.xlu0 %1788
        %1792 = vset.pattern.permute.xlu0 0
        %1793 = vperm.xlu0 %1792, %v1665
        %v1794 = vpop.permute.xlu0 %1793
        %1797 = vset.pattern.permute.xlu0 0
        %1798 = vperm.xlu0 %1797, %v1667
        %v1799 = vpop.permute.xlu0 %1798
        %1802 = vset.pattern.permute.xlu0 0
        %1803 = vperm.xlu0 %1802, %v1669
        %v1804 = vpop.permute.xlu0 %1803
        %1807 = vset.pattern.permute.xlu0 0
        %1808 = vperm.xlu0 %1807, %v1671
        %v1809 = vpop.permute.xlu0 %1808
        %1812 = vset.pattern.permute.xlu0 0
        %1813 = vperm.xlu0 %1812, %v1673
        %v1814 = vpop.permute.xlu0 %1813
        %1817 = vset.pattern.permute.xlu0 0
        %1818 = vperm.xlu0 %1817, %v1675
        %v1819 = vpop.permute.xlu0 %1818
        %1822 = vset.pattern.permute.xlu0 0
        %1823 = vperm.xlu0 %1822, %v1677
        %v1824 = vpop.permute.xlu0 %1823
        %1827 = vset.pattern.permute.xlu0 0
        %1828 = vperm.xlu0 %1827, %v1679
        %v1829 = vpop.permute.xlu0 %1828
        %1832 = vset.pattern.permute.xlu0 0
        %1833 = vperm.xlu0 %1832, %v1681
        %v1834 = vpop.permute.xlu0 %1833
        %1837 = vset.pattern.permute.xlu0 0
        %1838 = vperm.xlu0 %1837, %v1683
        %v1839 = vpop.permute.xlu0 %1838
        %1842 = vset.pattern.permute.xlu0 0
        %1843 = vperm.xlu0 %1842, %v1685
        %v1844 = vpop.permute.xlu0 %1843
        %v1846 = vmul.f32 %v246, %v1689
        %v1847 = vmul.f32 %v247, %v1689
        %v1848 = vmul.f32 %v248, %v1694
        %v1849 = vmul.f32 %v249, %v1694
        %v1850 = vmul.f32 %v250, %v1699
        %v1851 = vmul.f32 %v251, %v1699
        %v1852 = vmul.f32 %v252, %v1704
        %v1853 = vmul.f32 %v253, %v1704
        %v1854 = vmul.f32 %v254, %v1709
        %v1855 = vmul.f32 %v255, %v1709
        %v1856 = vmul.f32 %v256, %v1714
        %v1857 = vmul.f32 %v257, %v1714
        %v1858 = vmul.f32 %v258, %v1719
        %v1859 = vmul.f32 %v259, %v1719
        %v1860 = vmul.f32 %v260, %v1724
        %v1861 = vmul.f32 %v261, %v1724
        %v1862 = vmul.f32 %v262, %v1729
        %v1863 = vmul.f32 %v263, %v1729
        %v1864 = vmul.f32 %v264, %v1734
        %v1865 = vmul.f32 %v265, %v1734
        %v1866 = vmul.f32 %v266, %v1739
        %v1867 = vmul.f32 %v267, %v1739
        %v1868 = vmul.f32 %v268, %v1744
        %v1869 = vmul.f32 %v269, %v1744
        %v1870 = vmul.f32 %v270, %v1749
        %v1871 = vmul.f32 %v271, %v1749
        %v1872 = vmul.f32 %v272, %v1754
        %v1873 = vmul.f32 %v273, %v1754
        %v1874 = vmul.f32 %v274, %v1759
        %v1875 = vmul.f32 %v275, %v1759
        %v1876 = vmul.f32 %v276, %v1764
        %v1877 = vmul.f32 %v277, %v1764
        %v1878 = vmul.f32 %v278, %v1769
        %v1879 = vmul.f32 %v279, %v1769
        %v1880 = vmul.f32 %v280, %v1774
        %v1881 = vmul.f32 %v281, %v1774
        %v1882 = vmul.f32 %v282, %v1779
        %v1883 = vmul.f32 %v283, %v1779
        %v1884 = vmul.f32 %v284, %v1784
        %v1885 = vmul.f32 %v285, %v1784
        %v1886 = vmul.f32 %v286, %v1789
        %v1887 = vmul.f32 %v287, %v1789
        %v1888 = vmul.f32 %v288, %v1794
        %v1889 = vmul.f32 %v289, %v1794
        %v1890 = vmul.f32 %v290, %v1799
        %v1891 = vmul.f32 %v291, %v1799
        %v1892 = vmul.f32 %v292, %v1804
        %v1893 = vmul.f32 %v293, %v1804
        %v1894 = vmul.f32 %v294, %v1809
        %v1895 = vmul.f32 %v295, %v1809
        %v1896 = vmul.f32 %v296, %v1814
        %v1897 = vmul.f32 %v297, %v1814
        %v1898 = vmul.f32 %v298, %v1819
        %v1899 = vmul.f32 %v299, %v1819
        %v1900 = vmul.f32 %v300, %v1824
        %v1901 = vmul.f32 %v301, %v1824
        %v1902 = vmul.f32 %v302, %v1829
        %v1903 = vmul.f32 %v303, %v1829
        %v1904 = vmul.f32 %v304, %v1834
        %v1905 = vmul.f32 %v305, %v1834
        %v1906 = vmul.f32 %v306, %v1839
        %v1907 = vmul.f32 %v307, %v1839
        %v1908 = vmul.f32 %v308, %v1844
        %v1909 = vmul.f32 %v309, %v1844
        %1910 = vst [vmem:[%s243] sm:$0xff] %v1846
        %1911 = vst [vmem:[%s243 + $0x8] sm:$0xff] %v1847
        %1912 = vst [vmem:[%s243 + $0x10] sm:$0xff] %v1848
        %1913 = vst [vmem:[%s243 + $0x18] sm:$0xff] %v1849
        %1914 = vst [vmem:[%s243 + $0x20] sm:$0xff] %v1850
        %1915 = vst [vmem:[%s243 + $0x28] sm:$0xff] %v1851
        %1916 = vst [vmem:[%s243 + $0x30] sm:$0xff] %v1852
        %1917 = vst [vmem:[%s243 + $0x38] sm:$0xff] %v1853
        %1918 = vst [vmem:[%s243 + $0x40] sm:$0xff] %v1854
        %1919 = vst [vmem:[%s243 + $0x48] sm:$0xff] %v1855
        %1920 = vst [vmem:[%s243 + $0x50] sm:$0xff] %v1856
        %1921 = vst [vmem:[%s243 + $0x58] sm:$0xff] %v1857
        %1922 = vst [vmem:[%s243 + $0x60] sm:$0xff] %v1858
        %1923 = vst [vmem:[%s243 + $0x68] sm:$0xff] %v1859
        %1924 = vst [vmem:[%s243 + $0x70] sm:$0xff] %v1860
        %1925 = vst [vmem:[%s243 + $0x78] sm:$0xff] %v1861
        %1926 = vst [vmem:[%s243 + $0x80] sm:$0xff] %v1862
        %1927 = vst [vmem:[%s243 + $0x88] sm:$0xff] %v1863
        %1928 = vst [vmem:[%s243 + $0x90] sm:$0xff] %v1864
        %1929 = vst [vmem:[%s243 + $0x98] sm:$0xff] %v1865
        %1930 = vst [vmem:[%s243 + $0xa0] sm:$0xff] %v1866
        %1931 = vst [vmem:[%s243 + $0xa8] sm:$0xff] %v1867
        %1932 = vst [vmem:[%s243 + $0xb0] sm:$0xff] %v1868
        %1933 = vst [vmem:[%s243 + $0xb8] sm:$0xff] %v1869
        %1934 = vst [vmem:[%s243 + $0xc0] sm:$0xff] %v1870
        %1935 = vst [vmem:[%s243 + $0xc8] sm:$0xff] %v1871
        %1936 = vst [vmem:[%s243 + $0xd0] sm:$0xff] %v1872
        %1937 = vst [vmem:[%s243 + $0xd8] sm:$0xff] %v1873
        %1938 = vst [vmem:[%s243 + $0xe0] sm:$0xff] %v1874
        %1939 = vst [vmem:[%s243 + $0xe8] sm:$0xff] %v1875
        %1940 = vst [vmem:[%s243 + $0xf0] sm:$0xff] %v1876
        %1941 = vst [vmem:[%s243 + $0xf8] sm:$0xff] %v1877
        %1942 = vst [vmem:[%s243 + $0x100] sm:$0xff] %v1878
        %1943 = vst [vmem:[%s243 + $0x108] sm:$0xff] %v1879
        %1944 = vst [vmem:[%s243 + $0x110] sm:$0xff] %v1880
        %1945 = vst [vmem:[%s243 + $0x118] sm:$0xff] %v1881
        %1946 = vst [vmem:[%s243 + $0x120] sm:$0xff] %v1882
        %1947 = vst [vmem:[%s243 + $0x128] sm:$0xff] %v1883
        %1948 = vst [vmem:[%s243 + $0x130] sm:$0xff] %v1884
        %1949 = vst [vmem:[%s243 + $0x138] sm:$0xff] %v1885
        %1950 = vst [vmem:[%s243 + $0x140] sm:$0xff] %v1886
        %1951 = vst [vmem:[%s243 + $0x148] sm:$0xff] %v1887
        %1952 = vst [vmem:[%s243 + $0x150] sm:$0xff] %v1888
        %1953 = vst [vmem:[%s243 + $0x158] sm:$0xff] %v1889
        %1954 = vst [vmem:[%s243 + $0x160] sm:$0xff] %v1890
        %1955 = vst [vmem:[%s243 + $0x168] sm:$0xff] %v1891
        %1956 = vst [vmem:[%s243 + $0x170] sm:$0xff] %v1892
        %1957 = vst [vmem:[%s243 + $0x178] sm:$0xff] %v1893
        %1958 = vst [vmem:[%s243 + $0x180] sm:$0xff] %v1894
        %1959 = vst [vmem:[%s243 + $0x188] sm:$0xff] %v1895
        %1960 = vst [vmem:[%s243 + $0x190] sm:$0xff] %v1896
        %1961 = vst [vmem:[%s243 + $0x198] sm:$0xff] %v1897
        %1962 = vst [vmem:[%s243 + $0x1a0] sm:$0xff] %v1898
        %1963 = vst [vmem:[%s243 + $0x1a8] sm:$0xff] %v1899
        %1964 = vst [vmem:[%s243 + $0x1b0] sm:$0xff] %v1900
        %1965 = vst [vmem:[%s243 + $0x1b8] sm:$0xff] %v1901
        %1966 = vst [vmem:[%s243 + $0x1c0] sm:$0xff] %v1902
        %1967 = vst [vmem:[%s243 + $0x1c8] sm:$0xff] %v1903
        %1968 = vst [vmem:[%s243 + $0x1d0] sm:$0xff] %v1904
        %1969 = vst [vmem:[%s243 + $0x1d8] sm:$0xff] %v1905
        %1970 = vst [vmem:[%s243 + $0x1e0] sm:$0xff] %v1906
        %1971 = vst [vmem:[%s243 + $0x1e8] sm:$0xff] %v1907
        %1972 = vst [vmem:[%s243 + $0x1f0] sm:$0xff] %v1908
        %1973 = vst [vmem:[%s243 + $0x1f8] sm:$0xff] %v1909
        %s1974 = sand.u32 %s140, 1
        %s1975 = scalar_lea.sflag [#allocation4], %s1974
        %s1976 = sand.u32 %s140, 1
        %s1977 = smul.addr %s1976, 512
        %s1978 = scalar_lea.vmem [#allocation5], %s1977
        // Predicated region
        $region45: #{tpu_custom_call.1} parent=39 // pred_check
          %p1979 = pneg %p150
        $region46: #{tpu_custom_call.1} parent=39 // pred_check_branch
          %1981 = sbr.rel (%p1979) target = $region48
        $region47: #{tpu_custom_call.1} parent=39 // pred_region
          %s1982 = smul.u32 4, %s22
          %s1984 = ssub.s32 8192, 8192
          %1985 = vsyncadd %s1975, %s1984
          %s1986 = smul.addr %s1982, 16
          %s1987 = smul.addr %s1986, 128
          %s1988 = scalar_lea.hbm %s5, %s1987
          %s1989 = sshll.u32 %s1978, 4
          %s1990 = int_to_ptr.vmem [resolvable:$true] %s1989
          %1995 = dma.vmem_to_hbm [thread:$0]  %s1990, 8192, %s1988, %s1975, 256, 256, 16
        $region48: #{tpu_custom_call.1} parent=39 // pred_fallthru
          _
      $region40: #{tpu_custom_call.1} parent=5 // pred_fallthru
        _
      %p1996 = scmp.le.s32.totalorder 2, %s17
      // Predicated region
      $region49: #{tpu_custom_call.1} parent=5 // pred_check
        %p1997 = pneg %p1996
      $region50: #{tpu_custom_call.1} parent=5 // pred_check_branch
        %1999 = sbr.rel (%p1997) target = $region52
      $region51: #{tpu_custom_call.1} parent=5 // pred_region
        %s2000 = ssub.s32 %s17, 2
        // Predicated region
        $region53: #{tpu_custom_call.1} parent=51 // pred_check
          %p2001 = pneg %p156
        $region54: #{tpu_custom_call.1} parent=51 // pred_check_branch
          %2003 = sbr.rel (%p2001) target = $region56
        $region55: #{tpu_custom_call.1} parent=51 // pred_region
          %s2004 = sand.u32 %s141, 1
          %s2005 = scalar_lea.sflag [#allocation4], %s2004
          %s2006 = sand.u32 %s141, 1
          %s2007 = smul.addr %s2006, 512
          %s2008 = scalar_lea.vmem [#allocation5], %s2007
          %2009 = dma.done %s2005, 8192
        $region56: #{tpu_custom_call.1} parent=51 // pred_fallthru
          _
      $region52: #{tpu_custom_call.1} parent=5 // pred_fallthru
        _
    $region6: #{tpu_custom_call.1} parent=1 // loop_footer
      %s21 = sadd.s32 1, %s17
    $region7: #{tpu_custom_call.1} parent=1 // loop_footer_branch
      %16 = sbr.rel target = $region3
    $region8: #{tpu_custom_call.1} parent=1 // loop_exit
      _
    %2010 = vsyncpa [#allocation3], 1
    %s2011 = scalar_lea.sflag [#allocation3], 1
    %2012 = vsyncpa %s2011, 1
    %2013 = vsyncpa [#allocation4], 1
    %s2014 = scalar_lea.sflag [#allocation4], 1
    %2015 = vsyncpa %s2014, 1

</llo_original>
